<compile_context>
chip_gen: v7x
topology: tpu7x:2x2x1
jax: 0.10.0
libtpu: 0.0.40
codegen_flags: <defaults>
</compile_context>

<pallas_src>
import functools

import jax
import jax.numpy as jnp
from jax.experimental import pallas as pl
from jax.experimental.pallas import tpu as pltpu


def _layernorm(v, w, b, eps):
    mu = jnp.mean(v, axis=-1, keepdims=True)
    var = jnp.mean(jnp.square(v - mu), axis=-1, keepdims=True)
    return (v - mu) * jax.lax.rsqrt(var + eps) * w + b


def encoder_layer_kernel(
    x_ref,
    wq_ref, wk_ref, wv_ref, bq_ref, bk_ref, bv_ref,
    wo_ref, bo_ref,
    w1_ref, b1_ref, w2_ref, b2_ref,
    n1w_ref, n1b_ref, n2w_ref, n2b_ref,
    out_ref, attnw_ref,
    *, nhead, eps,
):
    bf16 = jnp.bfloat16
    f32 = jnp.float32

    x = x_ref[...]                              # (S, E) f32 — one batch element per grid step
    S, E = x.shape
    H = nhead
    Dh = E // H

    n1w = n1w_ref[0, :]
    n1b = n1b_ref[0, :]

    # ---------- self-attention on norm1(x) (matches the module's forward) ----------
    xn = _layernorm(x, n1w, n1b, eps)
    xnb = xn.astype(bf16)

    q = jnp.dot(xnb, wq_ref[...], preferred_element_type=f32) + bq_ref[0, :]
    k = jnp.dot(xnb, wk_ref[...], preferred_element_type=f32) + bk_ref[0, :]
    v = jnp.dot(xnb, wv_ref[...], preferred_element_type=f32) + bv_ref[0, :]
    q = q * (1.0 / jnp.sqrt(jnp.float32(Dh)))   # PyTorch MHA scales q (incl. bias)

    # Split heads (static slices) onto a new major axis -> (H, S, Dh), then do all heads
    # with a single batched score matmul, a single softmax, a single context matmul.
    qh = jnp.stack([q[:, h * Dh:(h + 1) * Dh] for h in range(H)], axis=0).astype(bf16)
    kh = jnp.stack([k[:, h * Dh:(h + 1) * Dh] for h in range(H)], axis=0).astype(bf16)
    vh = jnp.stack([v[:, h * Dh:(h + 1) * Dh] for h in range(H)], axis=0).astype(bf16)

    s = jnp.einsum('hqd,hkd->hqk', qh, kh, preferred_element_type=f32)   # (H, S, S)
    m = jnp.max(s, axis=-1, keepdims=True)
    e = jnp.exp(s - m)
    p = e * pl.reciprocal(jnp.sum(e, axis=-1, keepdims=True), approx=True)

    # need_weights=True, average_attn_weights=True -> mean over heads.
    attnw_ref[...] = jnp.mean(p, axis=0)                                 # (S, S)

    ctx = jnp.einsum('hqk,hkd->hqd', p.astype(bf16), vh,
                     preferred_element_type=f32)                         # (H, S, Dh)
    ctx = jnp.concatenate([ctx[h] for h in range(H)], axis=-1)           # (S, E)

    attn = jnp.dot(ctx.astype(bf16), wo_ref[...],
                   preferred_element_type=f32) + bo_ref[0, :]

    # ---------- residual + norm1, FFN + norm2 (exact reference structure) ----------
    # x = norm1(x + dropout1(attn));  x = norm2(x + ff(x))   (dropout = identity in eval)
    x2 = _layernorm(x + attn, n1w, n1b, eps)

    h1 = jnp.dot(x2.astype(bf16), w1_ref[...],
                 preferred_element_type=f32) + b1_ref[0, :]
    h1 = jnp.maximum(h1, 0.0)                                            # relu
    ff = jnp.dot(h1.astype(bf16), w2_ref[...],
                 preferred_element_type=f32) + b2_ref[0, :]

    out_ref[...] = _layernorm(x2 + ff, n2w_ref[0, :], n2b_ref[0, :], eps)


def transformer_encoder_layer(src, params, *, nhead, eps=1e-5):
    """src: (S, B, E) float32 (batch_first=False).
    Returns (out (S, B, E), attn_weights (B, S, S))."""
    S, B, E = src.shape
    F = params['w1'].shape[0]
    bf16 = jnp.bfloat16

    # Batch-major so the grid can parallelize over B (2 TensorCores on v7x).
    # TODO(synk): at large S*B feed (S, B, E) directly as the token axis to avoid this
    # wrapper transpose (extra HBM round trip at scale; negligible here).
    x = jnp.transpose(src, (1, 0, 2))                          # (B, S, E)

    # Pre-transpose every weight to (in, out) so the kernel does natural (M,K)x(K,N)
    # matmuls; cast matmul weights to bf16 (accumulation stays f32 inside the kernel).
    wqkv_t = jnp.transpose(params['wqkv'])                     # (E, 3E)
    wq_t = wqkv_t[:, 0:E].astype(bf16)
    wk_t = wqkv_t[:, E:2 * E].astype(bf16)
    wv_t = wqkv_t[:, 2 * E:3 * E].astype(bf16)
    bq = params['bqkv'][0:E][None, :]
    bk = params['bqkv'][E:2 * E][None, :]
    bv = params['bqkv'][2 * E:3 * E][None, :]
    wo_t = jnp.transpose(params['wo']).astype(bf16)            # (E, E)
    w1_t = jnp.transpose(params['w1']).astype(bf16)            # (E, F)
    w2_t = jnp.transpose(params['w2']).astype(bf16)            # (F, E)

    args = (
        x,
        wq_t, wk_t, wv_t, bq, bk, bv,
        wo_t, params['bo'][None, :],
        w1_t, params['b1'][None, :],
        w2_t, params['b2'][None, :],
        params['n1w'][None, :], params['n1b'][None, :],
        params['n2w'][None, :], params['n2b'][None, :],
    )

    def resident(shape):
        # Full-array block with constant index map: DMA'd once, revisited each grid step.
        return pl.BlockSpec(shape, lambda b, _n=len(shape): (0,) * _n)

    in_specs = [
        pl.BlockSpec((None, S, E), lambda b: (b, 0, 0)),        # x: one batch row per step
        resident((E, E)), resident((E, E)), resident((E, E)),   # wq, wk, wv
        resident((1, E)), resident((1, E)), resident((1, E)),   # bq, bk, bv
        resident((E, E)), resident((1, E)),                     # wo, bo
        resident((E, F)), resident((1, F)),                     # w1, b1
        resident((F, E)), resident((1, E)),                     # w2, b2
        resident((1, E)), resident((1, E)),                     # norm1 w, b
        resident((1, E)), resident((1, E)),                     # norm2 w, b
    ]
    # TODO(synk): out/attnw last dims (E=32 / S=8) lower to masked stores; pad/pack to 128
    # lanes only if the surrounding model permits changing the output layout.
    out_specs = (
        pl.BlockSpec((None, S, E), lambda b: (b, 0, 0)),
        pl.BlockSpec((None, S, S), lambda b: (b, 0, 0)),
    )

    out, attnw = pl.pallas_call(
        functools.partial(encoder_layer_kernel, nhead=nhead, eps=eps),
        grid=(B,),
        in_specs=in_specs,
        out_specs=out_specs,
        out_shape=(jax.ShapeDtypeStruct((B, S, E), jnp.float32),
                   jax.ShapeDtypeStruct((B, S, S), jnp.float32)),
        compiler_params=pltpu.CompilerParams(
            dimension_semantics=("parallel",),
            vmem_limit_bytes=32 * 1024 * 1024),
    )(*args)
    return jnp.transpose(out, (1, 0, 2)), attnw


# -------------------- pure-JAX reference (f32) for a sanity check --------------------
def ref_forward(src, params, *, nhead, eps=1e-5):
    x = jnp.transpose(src, (1, 0, 2))
    B, S, E = x.shape
    Dh = E // nhead
    xn = _layernorm(x, params['n1w'], params['n1b'], eps)
    qkv = jnp.einsum('bse,fe->bsf', xn, params['wqkv']) + params['bqkv']
    q, k, v = qkv[..., :E], qkv[..., E:2 * E], qkv[..., 2 * E:]
    scale = 1.0 / jnp.sqrt(jnp.float32(Dh))
    outs, wsum = [], jnp.zeros((B, S, S), jnp.float32)
    for h in range(nhead):
        sl = slice(h * Dh, (h + 1) * Dh)
        s = jnp.einsum('bqd,bkd->bqk', q[..., sl] * scale, k[..., sl])
        m = jnp.max(s, axis=-1, keepdims=True)
        e = jnp.exp(s - m)
        p = e / jnp.sum(e, axis=-1, keepdims=True)
        outs.append(jnp.einsum('bqk,bkd->bqd', p, v[..., sl]))
        wsum = wsum + p
    attn = jnp.concatenate(outs, axis=-1)
    attn = jnp.einsum('bse,fe->bsf', attn, params['wo']) + params['bo']
    x2 = _layernorm(x + attn, params['n1w'], params['n1b'], eps)
    h1 = jnp.maximum(jnp.einsum('bse,fe->bsf', x2, params['w1']) + params['b1'], 0.0)
    ff = jnp.einsum('bsf,ef->bse', h1, params['w2']) + params['b2']
    out = _layernorm(x2 + ff, params['n2w'], params['n2b'], eps)
    return jnp.transpose(out, (1, 0, 2)), wsum / nhead


if __name__ == "__main__":
    d_model, nhead, dim_ff = 32, 4, 64
    S, B = 8, 2

    key = jax.random.PRNGKey(0)
    ks = jax.random.split(key, 12)
    f32 = jnp.float32
    params = {
        'wqkv': 0.1 * jax.random.normal(ks[0], (3 * d_model, d_model), f32),
        'bqkv': 0.1 * jax.random.normal(ks[1], (3 * d_model,), f32),
        'wo':   0.1 * jax.random.normal(ks[2], (d_model, d_model), f32),
        'bo':   0.1 * jax.random.normal(ks[3], (d_model,), f32),
        'w1':   0.1 * jax.random.normal(ks[4], (dim_ff, d_model), f32),
        'b1':   0.1 * jax.random.normal(ks[5], (dim_ff,), f32),
        'w2':   0.1 * jax.random.normal(ks[6], (d_model, dim_ff), f32),
        'b2':   0.1 * jax.random.normal(ks[7], (d_model,), f32),
        'n1w':  jnp.ones((d_model,), f32),
        'n1b':  jnp.zeros((d_model,), f32),
        'n2w':  jnp.ones((d_model,), f32),
        'n2b':  jnp.zeros((d_model,), f32),
    }
    src = jax.random.normal(ks[8], (S, B, d_model), f32)   # (seq, batch, feature)

    out, attn_w = jax.jit(
        functools.partial(transformer_encoder_layer, nhead=nhead))(src, params)
    out = jax.block_until_ready(out)
    attn_w = jax.block_until_ready(attn_w)

    ref_out, ref_w = ref_forward(src, params, nhead=nhead)
    assert out.shape == (S, B, d_model) and attn_w.shape == (B, S, S)
    assert jnp.allclose(out, ref_out, atol=2e-2, rtol=2e-2)
    assert jnp.allclose(attn_w, ref_w, atol=2e-2, rtol=2e-2)

    print("KERNEL_OK")
</pallas_src>

<mosaic_0001>
module attributes {stable_mosaic.version = 11 : i64} {
  func.func @encoder_layer_kernel(%arg0: i32, %arg1: memref<1x8x32xf32, #tpu.memory_space<vmem>>, %arg2: memref<32x32xbf16, #tpu.memory_space<vmem>>, %arg3: memref<32x32xbf16, #tpu.memory_space<vmem>>, %arg4: memref<32x32xbf16, #tpu.memory_space<vmem>>, %arg5: memref<1x32xf32, #tpu.memory_space<vmem>>, %arg6: memref<1x32xf32, #tpu.memory_space<vmem>>, %arg7: memref<1x32xf32, #tpu.memory_space<vmem>>, %arg8: memref<32x32xbf16, #tpu.memory_space<vmem>>, %arg9: memref<1x32xf32, #tpu.memory_space<vmem>>, %arg10: memref<32x64xbf16, #tpu.memory_space<vmem>>, %arg11: memref<1x64xf32, #tpu.memory_space<vmem>>, %arg12: memref<64x32xbf16, #tpu.memory_space<vmem>>, %arg13: memref<1x32xf32, #tpu.memory_space<vmem>>, %arg14: memref<1x32xf32, #tpu.memory_space<vmem>>, %arg15: memref<1x32xf32, #tpu.memory_space<vmem>>, %arg16: memref<1x32xf32, #tpu.memory_space<vmem>>, %arg17: memref<1x32xf32, #tpu.memory_space<vmem>>, %arg18: memref<1x8x32xf32, #tpu.memory_space<vmem>>, %arg19: memref<1x8x8xf32, #tpu.memory_space<vmem>>) attributes {dimension_semantics = [#tpu.dimension_semantics<parallel>], iteration_bounds = array<i64: 2>, scalar_prefetch = 0 : i64, scratch_operands = 0 : i64, tpu.core_type = #tpu.core_type<tc>, window_params = [{transform_indices = @transform_0, window_bounds = array<i64: 1, 8, 32>}, {pipeline_mode = #tpu.pipeline_mode<synchronous>, transform_indices = @transform_1, window_bounds = array<i64: 32, 32>}, {pipeline_mode = #tpu.pipeline_mode<synchronous>, transform_indices = @transform_2, window_bounds = array<i64: 32, 32>}, {pipeline_mode = #tpu.pipeline_mode<synchronous>, transform_indices = @transform_3, window_bounds = array<i64: 32, 32>}, {pipeline_mode = #tpu.pipeline_mode<synchronous>, transform_indices = @transform_4, window_bounds = array<i64: 1, 32>}, {pipeline_mode = #tpu.pipeline_mode<synchronous>, transform_indices = @transform_5, window_bounds = array<i64: 1, 32>}, {pipeline_mode = #tpu.pipeline_mode<synchronous>, transform_indices = @transform_6, window_bounds = array<i64: 1, 32>}, {pipeline_mode = #tpu.pipeline_mode<synchronous>, transform_indices = @transform_7, window_bounds = array<i64: 32, 32>}, {pipeline_mode = #tpu.pipeline_mode<synchronous>, transform_indices = @transform_8, window_bounds = array<i64: 1, 32>}, {pipeline_mode = #tpu.pipeline_mode<synchronous>, transform_indices = @transform_9, window_bounds = array<i64: 32, 64>}, {pipeline_mode = #tpu.pipeline_mode<synchronous>, transform_indices = @transform_10, window_bounds = array<i64: 1, 64>}, {pipeline_mode = #tpu.pipeline_mode<synchronous>, transform_indices = @transform_11, window_bounds = array<i64: 64, 32>}, {pipeline_mode = #tpu.pipeline_mode<synchronous>, transform_indices = @transform_12, window_bounds = array<i64: 1, 32>}, {pipeline_mode = #tpu.pipeline_mode<synchronous>, transform_indices = @transform_13, window_bounds = array<i64: 1, 32>}, {pipeline_mode = #tpu.pipeline_mode<synchronous>, transform_indices = @transform_14, window_bounds = array<i64: 1, 32>}, {pipeline_mode = #tpu.pipeline_mode<synchronous>, transform_indices = @transform_15, window_bounds = array<i64: 1, 32>}, {pipeline_mode = #tpu.pipeline_mode<synchronous>, transform_indices = @transform_16, window_bounds = array<i64: 1, 32>}, {transform_indices = @transform_17, window_bounds = array<i64: 1, 8, 32>}, {transform_indices = @transform_18, window_bounds = array<i64: 1, 8, 8>}]} {
    %c0 = arith.constant 0 : index
    %c0_0 = arith.constant 0 : index
    %c0_1 = arith.constant 0 : index
    %0 = vector.load %arg1[%c0, %c0_0, %c0_1] : memref<1x8x32xf32, #tpu.memory_space<vmem>>, vector<1x8x32xf32>
    %1 = vector.shape_cast %0 : vector<1x8x32xf32> to vector<8x32xf32>
    %c0_2 = arith.constant 0 : index
    %c0_3 = arith.constant 0 : index
    %2 = vector.load %arg14[%c0_2, %c0_3] : memref<1x32xf32, #tpu.memory_space<vmem>>, vector<1x32xf32>
    %3 = vector.shape_cast %2 : vector<1x32xf32> to vector<32xf32>
    %c0_4 = arith.constant 0 : index
    %c0_5 = arith.constant 0 : index
    %4 = vector.load %arg15[%c0_4, %c0_5] : memref<1x32xf32, #tpu.memory_space<vmem>>, vector<1x32xf32>
    %5 = vector.shape_cast %4 : vector<1x32xf32> to vector<32xf32>
    %cst = arith.constant dense<0.000000e+00> : vector<8xf32>
    %6 = vector.multi_reduction <add>, %1, %cst [1] : vector<8x32xf32> to vector<8xf32>
    %7 = vector.shape_cast %6 : vector<8xf32> to vector<8x1xf32>
    %cst_6 = arith.constant 3.200000e+01 : f32
    %8 = vector.broadcast %cst_6 : f32 to vector<8x1xf32>
    %9 = arith.divf %7, %8 : vector<8x1xf32>
    %10 = vector.broadcast %9 : vector<8x1xf32> to vector<8x32xf32>
    %11 = arith.subf %1, %10 : vector<8x32xf32>
    %12 = arith.mulf %11, %11 : vector<8x32xf32>
    %cst_7 = arith.constant dense<0.000000e+00> : vector<8xf32>
    %13 = vector.multi_reduction <add>, %12, %cst_7 [1] : vector<8x32xf32> to vector<8xf32>
    %14 = vector.shape_cast %13 : vector<8xf32> to vector<8x1xf32>
    %cst_8 = arith.constant 3.200000e+01 : f32
    %15 = vector.broadcast %cst_8 : f32 to vector<8x1xf32>
    %16 = arith.divf %14, %15 : vector<8x1xf32>
    %17 = vector.broadcast %9 : vector<8x1xf32> to vector<8x32xf32>
    %18 = arith.subf %1, %17 : vector<8x32xf32>
    %cst_9 = arith.constant 9.99999974E-6 : f32
    %19 = vector.broadcast %cst_9 : f32 to vector<8x1xf32>
    %20 = arith.addf %16, %19 : vector<8x1xf32>
    %21 = math.rsqrt %20 : vector<8x1xf32>
    %22 = vector.broadcast %21 : vector<8x1xf32> to vector<8x32xf32>
    %23 = arith.mulf %18, %22 : vector<8x32xf32>
    %24 = vector.shape_cast %3 : vector<32xf32> to vector<1x32xf32>
    %25 = vector.broadcast %24 : vector<1x32xf32> to vector<8x32xf32>
    %26 = arith.mulf %23, %25 : vector<8x32xf32>
    %27 = vector.shape_cast %5 : vector<32xf32> to vector<1x32xf32>
    %28 = vector.broadcast %27 : vector<1x32xf32> to vector<8x32xf32>
    %29 = arith.addf %26, %28 : vector<8x32xf32>
    %30 = arith.truncf %29 : vector<8x32xf32> to vector<8x32xbf16>
    %c0_10 = arith.constant 0 : index
    %c0_11 = arith.constant 0 : index
    %31 = vector.load %arg2[%c0_10, %c0_11] : memref<32x32xbf16, #tpu.memory_space<vmem>>, vector<32x32xbf16>
    %cst_12 = arith.constant dense<0.000000e+00> : vector<8x32xf32>
    %32 = tpu.matmul %30, %31, %cst_12 {dimension_numbers = #tpu.dot_dimension_numbers<[1], [0], [0], [1], [0, 0, 1, 1], [], []>} : vector<8x32xbf16>, vector<32x32xbf16>, vector<8x32xf32> -> vector<8x32xf32>
    %c0_13 = arith.constant 0 : index
    %c0_14 = arith.constant 0 : index
    %33 = vector.load %arg5[%c0_13, %c0_14] : memref<1x32xf32, #tpu.memory_space<vmem>>, vector<1x32xf32>
    %34 = vector.shape_cast %33 : vector<1x32xf32> to vector<32xf32>
    %35 = vector.shape_cast %34 : vector<32xf32> to vector<1x32xf32>
    %36 = vector.broadcast %35 : vector<1x32xf32> to vector<8x32xf32>
    %37 = arith.addf %32, %36 : vector<8x32xf32>
    %c0_15 = arith.constant 0 : index
    %c0_16 = arith.constant 0 : index
    %38 = vector.load %arg3[%c0_15, %c0_16] : memref<32x32xbf16, #tpu.memory_space<vmem>>, vector<32x32xbf16>
    %cst_17 = arith.constant dense<0.000000e+00> : vector<8x32xf32>
    %39 = tpu.matmul %30, %38, %cst_17 {dimension_numbers = #tpu.dot_dimension_numbers<[1], [0], [0], [1], [0, 0, 1, 1], [], []>} : vector<8x32xbf16>, vector<32x32xbf16>, vector<8x32xf32> -> vector<8x32xf32>
    %c0_18 = arith.constant 0 : index
    %c0_19 = arith.constant 0 : index
    %40 = vector.load %arg6[%c0_18, %c0_19] : memref<1x32xf32, #tpu.memory_space<vmem>>, vector<1x32xf32>
    %41 = vector.shape_cast %40 : vector<1x32xf32> to vector<32xf32>
    %42 = vector.shape_cast %41 : vector<32xf32> to vector<1x32xf32>
    %43 = vector.broadcast %42 : vector<1x32xf32> to vector<8x32xf32>
    %44 = arith.addf %39, %43 : vector<8x32xf32>
    %c0_20 = arith.constant 0 : index
    %c0_21 = arith.constant 0 : index
    %45 = vector.load %arg4[%c0_20, %c0_21] : memref<32x32xbf16, #tpu.memory_space<vmem>>, vector<32x32xbf16>
    %cst_22 = arith.constant dense<0.000000e+00> : vector<8x32xf32>
    %46 = tpu.matmul %30, %45, %cst_22 {dimension_numbers = #tpu.dot_dimension_numbers<[1], [0], [0], [1], [0, 0, 1, 1], [], []>} : vector<8x32xbf16>, vector<32x32xbf16>, vector<8x32xf32> -> vector<8x32xf32>
    %c0_23 = arith.constant 0 : index
    %c0_24 = arith.constant 0 : index
    %47 = vector.load %arg7[%c0_23, %c0_24] : memref<1x32xf32, #tpu.memory_space<vmem>>, vector<1x32xf32>
    %48 = vector.shape_cast %47 : vector<1x32xf32> to vector<32xf32>
    %49 = vector.shape_cast %48 : vector<32xf32> to vector<1x32xf32>
    %50 = vector.broadcast %49 : vector<1x32xf32> to vector<8x32xf32>
    %51 = arith.addf %46, %50 : vector<8x32xf32>
    %cst_25 = arith.constant 8.000000e+00 : f32
    %52 = math.sqrt %cst_25 : f32
    %cst_26 = arith.constant 1.000000e+00 : f32
    %53 = arith.divf %cst_26, %52 : f32
    %54 = vector.broadcast %53 : f32 to vector<8x32xf32>
    %55 = arith.mulf %37, %54 : vector<8x32xf32>
    %56 = vector.extract_strided_slice %55 {offsets = [0, 0], sizes = [8, 8], strides = [1, 1]} : vector<8x32xf32> to vector<8x8xf32>
    %57 = vector.extract_strided_slice %55 {offsets = [0, 8], sizes = [8, 8], strides = [1, 1]} : vector<8x32xf32> to vector<8x8xf32>
    %58 = vector.extract_strided_slice %55 {offsets = [0, 16], sizes = [8, 8], strides = [1, 1]} : vector<8x32xf32> to vector<8x8xf32>
    %59 = vector.extract_strided_slice %55 {offsets = [0, 24], sizes = [8, 8], strides = [1, 1]} : vector<8x32xf32> to vector<8x8xf32>
    %60 = vector.shape_cast %56 : vector<8x8xf32> to vector<1x8x8xf32>
    %61 = vector.shape_cast %57 : vector<8x8xf32> to vector<1x8x8xf32>
    %62 = vector.shape_cast %58 : vector<8x8xf32> to vector<1x8x8xf32>
    %63 = vector.shape_cast %59 : vector<8x8xf32> to vector<1x8x8xf32>
    %64 = tpu.concatenate %60, %61, %62, %63 in 0 : vector<1x8x8xf32>, vector<1x8x8xf32>, vector<1x8x8xf32>, vector<1x8x8xf32> -> vector<4x8x8xf32>
    %65 = arith.truncf %64 : vector<4x8x8xf32> to vector<4x8x8xbf16>
    %66 = vector.extract_strided_slice %44 {offsets = [0, 0], sizes = [8, 8], strides = [1, 1]} : vector<8x32xf32> to vector<8x8xf32>
    %67 = vector.extract_strided_slice %44 {offsets = [0, 8], sizes = [8, 8], strides = [1, 1]} : vector<8x32xf32> to vector<8x8xf32>
    %68 = vector.extract_strided_slice %44 {offsets = [0, 16], sizes = [8, 8], strides = [1, 1]} : vector<8x32xf32> to vector<8x8xf32>
    %69 = vector.extract_strided_slice %44 {offsets = [0, 24], sizes = [8, 8], strides = [1, 1]} : vector<8x32xf32> to vector<8x8xf32>
    %70 = vector.shape_cast %66 : vector<8x8xf32> to vector<1x8x8xf32>
    %71 = vector.shape_cast %67 : vector<8x8xf32> to vector<1x8x8xf32>
    %72 = vector.shape_cast %68 : vector<8x8xf32> to vector<1x8x8xf32>
    %73 = vector.shape_cast %69 : vector<8x8xf32> to vector<1x8x8xf32>
    %74 = tpu.concatenate %70, %71, %72, %73 in 0 : vector<1x8x8xf32>, vector<1x8x8xf32>, vector<1x8x8xf32>, vector<1x8x8xf32> -> vector<4x8x8xf32>
    %75 = arith.truncf %74 : vector<4x8x8xf32> to vector<4x8x8xbf16>
    %76 = vector.extract_strided_slice %51 {offsets = [0, 0], sizes = [8, 8], strides = [1, 1]} : vector<8x32xf32> to vector<8x8xf32>
    %77 = vector.extract_strided_slice %51 {offsets = [0, 8], sizes = [8, 8], strides = [1, 1]} : vector<8x32xf32> to vector<8x8xf32>
    %78 = vector.extract_strided_slice %51 {offsets = [0, 16], sizes = [8, 8], strides = [1, 1]} : vector<8x32xf32> to vector<8x8xf32>
    %79 = vector.extract_strided_slice %51 {offsets = [0, 24], sizes = [8, 8], strides = [1, 1]} : vector<8x32xf32> to vector<8x8xf32>
    %80 = vector.shape_cast %76 : vector<8x8xf32> to vector<1x8x8xf32>
    %81 = vector.shape_cast %77 : vector<8x8xf32> to vector<1x8x8xf32>
    %82 = vector.shape_cast %78 : vector<8x8xf32> to vector<1x8x8xf32>
    %83 = vector.shape_cast %79 : vector<8x8xf32> to vector<1x8x8xf32>
    %84 = tpu.concatenate %80, %81, %82, %83 in 0 : vector<1x8x8xf32>, vector<1x8x8xf32>, vector<1x8x8xf32>, vector<1x8x8xf32> -> vector<4x8x8xf32>
    %85 = arith.truncf %84 : vector<4x8x8xf32> to vector<4x8x8xbf16>
    "tpu.trace_start"() <{level = 10 : i32, message = "hqd,hkd->hqk"}> : () -> ()
    %cst_27 = arith.constant dense<0.000000e+00> : vector<4x8x8xf32>
    %86 = tpu.matmul %65, %75, %cst_27 {dimension_numbers = #tpu.dot_dimension_numbers<[2], [2], [1], [1], [0, 0, 0, 1, 1, 1], [0], [0]>} : vector<4x8x8xbf16>, vector<4x8x8xbf16>, vector<4x8x8xf32> -> vector<4x8x8xf32>
    "tpu.trace_stop"() : () -> ()
    %cst_28 = arith.constant dense<0xFF800000> : vector<4x8xf32>
    %87 = vector.multi_reduction <maximumf>, %86, %cst_28 [2] : vector<4x8x8xf32> to vector<4x8xf32>
    %88 = vector.shape_cast %87 : vector<4x8xf32> to vector<4x8x1xf32>
    %89 = vector.broadcast %88 : vector<4x8x1xf32> to vector<4x8x8xf32>
    %90 = arith.subf %86, %89 : vector<4x8x8xf32>
    %91 = math.exp %90 : vector<4x8x8xf32>
    %cst_29 = arith.constant dense<0.000000e+00> : vector<4x8xf32>
    %92 = vector.multi_reduction <add>, %91, %cst_29 [2] : vector<4x8x8xf32> to vector<4x8xf32>
    %93 = vector.shape_cast %92 : vector<4x8xf32> to vector<4x8x1xf32>
    %94 = tpu.reciprocal %93 {approx = true} : vector<4x8x1xf32> -> vector<4x8x1xf32>
    %95 = vector.broadcast %94 : vector<4x8x1xf32> to vector<4x8x8xf32>
    %96 = arith.mulf %91, %95 : vector<4x8x8xf32>
    %cst_30 = arith.constant dense<0.000000e+00> : vector<8x8xf32>
    %97 = vector.multi_reduction <add>, %96, %cst_30 [0] : vector<4x8x8xf32> to vector<8x8xf32>
    %cst_31 = arith.constant 4.000000e+00 : f32
    %98 = vector.broadcast %cst_31 : f32 to vector<8x8xf32>
    %99 = arith.divf %97, %98 : vector<8x8xf32>
    %c0_32 = arith.constant 0 : index
    %c0_33 = arith.constant 0 : index
    %c0_34 = arith.constant 0 : index
    %100 = vector.load %arg19[%c0_32, %c0_33, %c0_34] : memref<1x8x8xf32, #tpu.memory_space<vmem>>, vector<1x8x8xf32>
    %101 = vector.shape_cast %100 : vector<1x8x8xf32> to vector<8x8xf32>
    %102 = vector.shape_cast %99 : vector<8x8xf32> to vector<1x8x8xf32>
    tpu.vector_store %arg19[%c0_32, %c0_33, %c0_34], %102 {strides = array<i32>} : memref<1x8x8xf32, #tpu.memory_space<vmem>>, vector<1x8x8xf32>,
    %103 = arith.truncf %96 : vector<4x8x8xf32> to vector<4x8x8xbf16>
    "tpu.trace_start"() <{level = 10 : i32, message = "hqk,hkd->hqd"}> : () -> ()
    %cst_35 = arith.constant dense<0.000000e+00> : vector<4x8x8xf32>
    %104 = tpu.matmul %103, %85, %cst_35 {dimension_numbers = #tpu.dot_dimension_numbers<[2], [1], [1], [2], [0, 0, 0, 1, 1, 2], [0], [0]>} : vector<4x8x8xbf16>, vector<4x8x8xbf16>, vector<4x8x8xf32> -> vector<4x8x8xf32>
    "tpu.trace_stop"() : () -> ()
    %105 = vector.extract_strided_slice %104 {offsets = [0, 0, 0], sizes = [1, 8, 8], strides = [1, 1, 1]} : vector<4x8x8xf32> to vector<1x8x8xf32>
    %106 = vector.shape_cast %105 : vector<1x8x8xf32> to vector<8x8xf32>
    %107 = vector.extract_strided_slice %104 {offsets = [1, 0, 0], sizes = [1, 8, 8], strides = [1, 1, 1]} : vector<4x8x8xf32> to vector<1x8x8xf32>
    %108 = vector.shape_cast %107 : vector<1x8x8xf32> to vector<8x8xf32>
    %109 = vector.extract_strided_slice %104 {offsets = [2, 0, 0], sizes = [1, 8, 8], strides = [1, 1, 1]} : vector<4x8x8xf32> to vector<1x8x8xf32>
    %110 = vector.shape_cast %109 : vector<1x8x8xf32> to vector<8x8xf32>
    %111 = vector.extract_strided_slice %104 {offsets = [3, 0, 0], sizes = [1, 8, 8], strides = [1, 1, 1]} : vector<4x8x8xf32> to vector<1x8x8xf32>
    %112 = vector.shape_cast %111 : vector<1x8x8xf32> to vector<8x8xf32>
    %113 = tpu.concatenate %106, %108, %110, %112 in 1 : vector<8x8xf32>, vector<8x8xf32>, vector<8x8xf32>, vector<8x8xf32> -> vector<8x32xf32>
    %114 = arith.truncf %113 : vector<8x32xf32> to vector<8x32xbf16>
    %c0_36 = arith.constant 0 : index
    %c0_37 = arith.constant 0 : index
    %115 = vector.load %arg8[%c0_36, %c0_37] : memref<32x32xbf16, #tpu.memory_space<vmem>>, vector<32x32xbf16>
    %cst_38 = arith.constant dense<0.000000e+00> : vector<8x32xf32>
    %116 = tpu.matmul %114, %115, %cst_38 {dimension_numbers = #tpu.dot_dimension_numbers<[1], [0], [0], [1], [0, 0, 1, 1], [], []>} : vector<8x32xbf16>, vector<32x32xbf16>, vector<8x32xf32> -> vector<8x32xf32>
    %c0_39 = arith.constant 0 : index
    %c0_40 = arith.constant 0 : index
    %117 = vector.load %arg9[%c0_39, %c0_40] : memref<1x32xf32, #tpu.memory_space<vmem>>, vector<1x32xf32>
    %118 = vector.shape_cast %117 : vector<1x32xf32> to vector<32xf32>
    %119 = vector.shape_cast %118 : vector<32xf32> to vector<1x32xf32>
    %120 = vector.broadcast %119 : vector<1x32xf32> to vector<8x32xf32>
    %121 = arith.addf %116, %120 : vector<8x32xf32>
    %122 = arith.addf %1, %121 : vector<8x32xf32>
    %cst_41 = arith.constant dense<0.000000e+00> : vector<8xf32>
    %123 = vector.multi_reduction <add>, %122, %cst_41 [1] : vector<8x32xf32> to vector<8xf32>
    %124 = vector.shape_cast %123 : vector<8xf32> to vector<8x1xf32>
    %cst_42 = arith.constant 3.200000e+01 : f32
    %125 = vector.broadcast %cst_42 : f32 to vector<8x1xf32>
    %126 = arith.divf %124, %125 : vector<8x1xf32>
    %127 = vector.broadcast %126 : vector<8x1xf32> to vector<8x32xf32>
    %128 = arith.subf %122, %127 : vector<8x32xf32>
    %129 = arith.mulf %128, %128 : vector<8x32xf32>
    %cst_43 = arith.constant dense<0.000000e+00> : vector<8xf32>
    %130 = vector.multi_reduction <add>, %129, %cst_43 [1] : vector<8x32xf32> to vector<8xf32>
    %131 = vector.shape_cast %130 : vector<8xf32> to vector<8x1xf32>
    %cst_44 = arith.constant 3.200000e+01 : f32
    %132 = vector.broadcast %cst_44 : f32 to vector<8x1xf32>
    %133 = arith.divf %131, %132 : vector<8x1xf32>
    %134 = vector.broadcast %126 : vector<8x1xf32> to vector<8x32xf32>
    %135 = arith.subf %122, %134 : vector<8x32xf32>
    %cst_45 = arith.constant 9.99999974E-6 : f32
    %136 = vector.broadcast %cst_45 : f32 to vector<8x1xf32>
    %137 = arith.addf %133, %136 : vector<8x1xf32>
    %138 = math.rsqrt %137 : vector<8x1xf32>
    %139 = vector.broadcast %138 : vector<8x1xf32> to vector<8x32xf32>
    %140 = arith.mulf %135, %139 : vector<8x32xf32>
    %141 = vector.shape_cast %3 : vector<32xf32> to vector<1x32xf32>
    %142 = vector.broadcast %141 : vector<1x32xf32> to vector<8x32xf32>
    %143 = arith.mulf %140, %142 : vector<8x32xf32>
    %144 = vector.shape_cast %5 : vector<32xf32> to vector<1x32xf32>
    %145 = vector.broadcast %144 : vector<1x32xf32> to vector<8x32xf32>
    %146 = arith.addf %143, %145 : vector<8x32xf32>
    %147 = arith.truncf %146 : vector<8x32xf32> to vector<8x32xbf16>
    %c0_46 = arith.constant 0 : index
    %c0_47 = arith.constant 0 : index
    %148 = vector.load %arg10[%c0_46, %c0_47] : memref<32x64xbf16, #tpu.memory_space<vmem>>, vector<32x64xbf16>
    %cst_48 = arith.constant dense<0.000000e+00> : vector<8x64xf32>
    %149 = tpu.matmul %147, %148, %cst_48 {dimension_numbers = #tpu.dot_dimension_numbers<[1], [0], [0], [1], [0, 0, 1, 1], [], []>} : vector<8x32xbf16>, vector<32x64xbf16>, vector<8x64xf32> -> vector<8x64xf32>
    %c0_49 = arith.constant 0 : index
    %c0_50 = arith.constant 0 : index
    %150 = vector.load %arg11[%c0_49, %c0_50] : memref<1x64xf32, #tpu.memory_space<vmem>>, vector<1x64xf32>
    %151 = vector.shape_cast %150 : vector<1x64xf32> to vector<64xf32>
    %152 = vector.shape_cast %151 : vector<64xf32> to vector<1x64xf32>
    %153 = vector.broadcast %152 : vector<1x64xf32> to vector<8x64xf32>
    %154 = arith.addf %149, %153 : vector<8x64xf32>
    %cst_51 = arith.constant 0.000000e+00 : f32
    %155 = vector.broadcast %cst_51 : f32 to vector<8x64xf32>
    %156 = arith.maximumf %154, %155 : vector<8x64xf32>
    %157 = arith.truncf %156 : vector<8x64xf32> to vector<8x64xbf16>
    %c0_52 = arith.constant 0 : index
    %c0_53 = arith.constant 0 : index
    %158 = vector.load %arg12[%c0_52, %c0_53] : memref<64x32xbf16, #tpu.memory_space<vmem>>, vector<64x32xbf16>
    %cst_54 = arith.constant dense<0.000000e+00> : vector<8x32xf32>
    %159 = tpu.matmul %157, %158, %cst_54 {dimension_numbers = #tpu.dot_dimension_numbers<[1], [0], [0], [1], [0, 0, 1, 1], [], []>} : vector<8x64xbf16>, vector<64x32xbf16>, vector<8x32xf32> -> vector<8x32xf32>
    %c0_55 = arith.constant 0 : index
    %c0_56 = arith.constant 0 : index
    %160 = vector.load %arg13[%c0_55, %c0_56] : memref<1x32xf32, #tpu.memory_space<vmem>>, vector<1x32xf32>
    %161 = vector.shape_cast %160 : vector<1x32xf32> to vector<32xf32>
    %162 = vector.shape_cast %161 : vector<32xf32> to vector<1x32xf32>
    %163 = vector.broadcast %162 : vector<1x32xf32> to vector<8x32xf32>
    %164 = arith.addf %159, %163 : vector<8x32xf32>
    %165 = arith.addf %146, %164 : vector<8x32xf32>
    %c0_57 = arith.constant 0 : index
    %c0_58 = arith.constant 0 : index
    %166 = vector.load %arg16[%c0_57, %c0_58] : memref<1x32xf32, #tpu.memory_space<vmem>>, vector<1x32xf32>
    %167 = vector.shape_cast %166 : vector<1x32xf32> to vector<32xf32>
    %c0_59 = arith.constant 0 : index
    %c0_60 = arith.constant 0 : index
    %168 = vector.load %arg17[%c0_59, %c0_60] : memref<1x32xf32, #tpu.memory_space<vmem>>, vector<1x32xf32>
    %169 = vector.shape_cast %168 : vector<1x32xf32> to vector<32xf32>
    %cst_61 = arith.constant dense<0.000000e+00> : vector<8xf32>
    %170 = vector.multi_reduction <add>, %165, %cst_61 [1] : vector<8x32xf32> to vector<8xf32>
    %171 = vector.shape_cast %170 : vector<8xf32> to vector<8x1xf32>
    %cst_62 = arith.constant 3.200000e+01 : f32
    %172 = vector.broadcast %cst_62 : f32 to vector<8x1xf32>
    %173 = arith.divf %171, %172 : vector<8x1xf32>
    %174 = vector.broadcast %173 : vector<8x1xf32> to vector<8x32xf32>
    %175 = arith.subf %165, %174 : vector<8x32xf32>
    %176 = arith.mulf %175, %175 : vector<8x32xf32>
    %cst_63 = arith.constant dense<0.000000e+00> : vector<8xf32>
    %177 = vector.multi_reduction <add>, %176, %cst_63 [1] : vector<8x32xf32> to vector<8xf32>
    %178 = vector.shape_cast %177 : vector<8xf32> to vector<8x1xf32>
    %cst_64 = arith.constant 3.200000e+01 : f32
    %179 = vector.broadcast %cst_64 : f32 to vector<8x1xf32>
    %180 = arith.divf %178, %179 : vector<8x1xf32>
    %181 = vector.broadcast %173 : vector<8x1xf32> to vector<8x32xf32>
    %182 = arith.subf %165, %181 : vector<8x32xf32>
    %cst_65 = arith.constant 9.99999974E-6 : f32
    %183 = vector.broadcast %cst_65 : f32 to vector<8x1xf32>
    %184 = arith.addf %180, %183 : vector<8x1xf32>
    %185 = math.rsqrt %184 : vector<8x1xf32>
    %186 = vector.broadcast %185 : vector<8x1xf32> to vector<8x32xf32>
    %187 = arith.mulf %182, %186 : vector<8x32xf32>
    %188 = vector.shape_cast %167 : vector<32xf32> to vector<1x32xf32>
    %189 = vector.broadcast %188 : vector<1x32xf32> to vector<8x32xf32>
    %190 = arith.mulf %187, %189 : vector<8x32xf32>
    %191 = vector.shape_cast %169 : vector<32xf32> to vector<1x32xf32>
    %192 = vector.broadcast %191 : vector<1x32xf32> to vector<8x32xf32>
    %193 = arith.addf %190, %192 : vector<8x32xf32>
    %c0_66 = arith.constant 0 : index
    %c0_67 = arith.constant 0 : index
    %c0_68 = arith.constant 0 : index
    %194 = vector.load %arg18[%c0_66, %c0_67, %c0_68] : memref<1x8x32xf32, #tpu.memory_space<vmem>>, vector<1x8x32xf32>
    %195 = vector.shape_cast %194 : vector<1x8x32xf32> to vector<8x32xf32>
    %196 = vector.shape_cast %193 : vector<8x32xf32> to vector<1x8x32xf32>
    tpu.vector_store %arg18[%c0_66, %c0_67, %c0_68], %196 {strides = array<i32>} : memref<1x8x32xf32, #tpu.memory_space<vmem>>, vector<1x8x32xf32>,
    return
  }
  func.func @transform_0(%arg0: i32) -> (i32, i32, i32) {
    %c0_i32 = arith.constant 0 : i32
    %c0_i32_0 = arith.constant 0 : i32
    %c0_i32_1 = arith.constant 0 : i32
    return %arg0, %c0_i32, %c0_i32_0 : i32, i32, i32
  }
  func.func @transform_1(%arg0: i32) -> (i32, i32) {
    %c0_i32 = arith.constant 0 : i32
    %c0_i32_0 = arith.constant 0 : i32
    %c0_i32_1 = arith.constant 0 : i32
    return %c0_i32, %c0_i32_0 : i32, i32
  }
  func.func @transform_2(%arg0: i32) -> (i32, i32) {
    %c0_i32 = arith.constant 0 : i32
    %c0_i32_0 = arith.constant 0 : i32
    %c0_i32_1 = arith.constant 0 : i32
    return %c0_i32, %c0_i32_0 : i32, i32
  }
  func.func @transform_3(%arg0: i32) -> (i32, i32) {
    %c0_i32 = arith.constant 0 : i32
    %c0_i32_0 = arith.constant 0 : i32
    %c0_i32_1 = arith.constant 0 : i32
    return %c0_i32, %c0_i32_0 : i32, i32
  }
  func.func @transform_4(%arg0: i32) -> (i32, i32) {
    %c0_i32 = arith.constant 0 : i32
    %c0_i32_0 = arith.constant 0 : i32
    %c0_i32_1 = arith.constant 0 : i32
    return %c0_i32, %c0_i32_0 : i32, i32
  }
  func.func @transform_5(%arg0: i32) -> (i32, i32) {
    %c0_i32 = arith.constant 0 : i32
    %c0_i32_0 = arith.constant 0 : i32
    %c0_i32_1 = arith.constant 0 : i32
    return %c0_i32, %c0_i32_0 : i32, i32
  }
  func.func @transform_6(%arg0: i32) -> (i32, i32) {
    %c0_i32 = arith.constant 0 : i32
    %c0_i32_0 = arith.constant 0 : i32
    %c0_i32_1 = arith.constant 0 : i32
    return %c0_i32, %c0_i32_0 : i32, i32
  }
  func.func @transform_7(%arg0: i32) -> (i32, i32) {
    %c0_i32 = arith.constant 0 : i32
    %c0_i32_0 = arith.constant 0 : i32
    %c0_i32_1 = arith.constant 0 : i32
    return %c0_i32, %c0_i32_0 : i32, i32
  }
  func.func @transform_8(%arg0: i32) -> (i32, i32) {
    %c0_i32 = arith.constant 0 : i32
    %c0_i32_0 = arith.constant 0 : i32
    %c0_i32_1 = arith.constant 0 : i32
    return %c0_i32, %c0_i32_0 : i32, i32
  }
  func.func @transform_9(%arg0: i32) -> (i32, i32) {
    %c0_i32 = arith.constant 0 : i32
    %c0_i32_0 = arith.constant 0 : i32
    %c0_i32_1 = arith.constant 0 : i32
    return %c0_i32, %c0_i32_0 : i32, i32
  }
  func.func @transform_10(%arg0: i32) -> (i32, i32) {
    %c0_i32 = arith.constant 0 : i32
    %c0_i32_0 = arith.constant 0 : i32
    %c0_i32_1 = arith.constant 0 : i32
    return %c0_i32, %c0_i32_0 : i32, i32
  }
  func.func @transform_11(%arg0: i32) -> (i32, i32) {
    %c0_i32 = arith.constant 0 : i32
    %c0_i32_0 = arith.constant 0 : i32
    %c0_i32_1 = arith.constant 0 : i32
    return %c0_i32, %c0_i32_0 : i32, i32
  }
  func.func @transform_12(%arg0: i32) -> (i32, i32) {
    %c0_i32 = arith.constant 0 : i32
    %c0_i32_0 = arith.constant 0 : i32
    %c0_i32_1 = arith.constant 0 : i32
    return %c0_i32, %c0_i32_0 : i32, i32
  }
  func.func @transform_13(%arg0: i32) -> (i32, i32) {
    %c0_i32 = arith.constant 0 : i32
    %c0_i32_0 = arith.constant 0 : i32
    %c0_i32_1 = arith.constant 0 : i32
    return %c0_i32, %c0_i32_0 : i32, i32
  }
  func.func @transform_14(%arg0: i32) -> (i32, i32) {
    %c0_i32 = arith.constant 0 : i32
    %c0_i32_0 = arith.constant 0 : i32
    %c0_i32_1 = arith.constant 0 : i32
    return %c0_i32, %c0_i32_0 : i32, i32
  }
  func.func @transform_15(%arg0: i32) -> (i32, i32) {
    %c0_i32 = arith.constant 0 : i32
    %c0_i32_0 = arith.constant 0 : i32
    %c0_i32_1 = arith.constant 0 : i32
    return %c0_i32, %c0_i32_0 : i32, i32
  }
  func.func @transform_16(%arg0: i32) -> (i32, i32) {
    %c0_i32 = arith.constant 0 : i32
    %c0_i32_0 = arith.constant 0 : i32
    %c0_i32_1 = arith.constant 0 : i32
    return %c0_i32, %c0_i32_0 : i32, i32
  }
  func.func @transform_17(%arg0: i32) -> (i32, i32, i32) {
    %c0_i32 = arith.constant 0 : i32
    %c0_i32_0 = arith.constant 0 : i32
    %c0_i32_1 = arith.constant 0 : i32
    return %arg0, %c0_i32, %c0_i32_0 : i32, i32, i32
  }
  func.func @transform_18(%arg0: i32) -> (i32, i32, i32) {
    %c0_i32 = arith.constant 0 : i32
    %c0_i32_0 = arith.constant 0 : i32
    %c0_i32_1 = arith.constant 0 : i32
    return %arg0, %c0_i32, %c0_i32_0 : i32, i32, i32
  }
}

</mosaic_0001>

<llo_original>
// kernel: transformer_encoder_layer.1
$region0: #{transformer_encoder_layer.1}
  #allocation0 [shape = 'u32[]', space=smem, size = 0x4, offset = 0x4, fixed_abs, tag = 'smem constant byte address 0x4 - core index']
  #allocation1 [shape = 'u32[144,128]{1,0:T(1,128)}', space=vmem, size = 0x12000, scoped, tag = 'internal scratch']
  %s0 = inlined_call_operand.vmem [shape: f32[2,8,32], index: 0, kind: input, shape index: {}]
  %s1 = inlined_call_operand.vmem [shape: bf16[32,32], index: 1, kind: input, shape index: {}]
  %s2 = inlined_call_operand.vmem [shape: bf16[32,32], index: 2, kind: input, shape index: {}]
  %s3 = inlined_call_operand.vmem [shape: bf16[32,32], index: 3, kind: input, shape index: {}]
  %s4 = inlined_call_operand.vmem [shape: f32[1,32], index: 4, kind: input, shape index: {}]
  %s5 = inlined_call_operand.vmem [shape: f32[1,32], index: 5, kind: input, shape index: {}]
  %s6 = inlined_call_operand.vmem [shape: f32[1,32], index: 6, kind: input, shape index: {}]
  %s7 = inlined_call_operand.vmem [shape: bf16[32,32], index: 7, kind: input, shape index: {}]
  %s8 = inlined_call_operand.vmem [shape: f32[1,32], index: 8, kind: input, shape index: {}]
  %s9 = inlined_call_operand.vmem [shape: bf16[32,64], index: 9, kind: input, shape index: {}]
  %s10 = inlined_call_operand.vmem [shape: f32[1,64], index: 10, kind: input, shape index: {}]
  %s11 = inlined_call_operand.vmem [shape: bf16[64,32], index: 11, kind: input, shape index: {}]
  %s12 = inlined_call_operand.vmem [shape: f32[1,32], index: 12, kind: input, shape index: {}]
  %s13 = inlined_call_operand.vmem [shape: f32[1,32], index: 13, kind: input, shape index: {}]
  %s14 = inlined_call_operand.vmem [shape: f32[1,32], index: 14, kind: input, shape index: {}]
  %s15 = inlined_call_operand.vmem [shape: f32[1,32], index: 15, kind: input, shape index: {}]
  %s16 = inlined_call_operand.vmem [shape: f32[1,32], index: 16, kind: input, shape index: {}]
  %s17 = inlined_call_operand.vmem [shape: f32[2,8,32], index: 17, kind: output, shape index: {0}]
  %s18 = inlined_call_operand.hbm [shape: f32[2,8,8], index: 18, kind: output, shape index: {1}]
  %19 = xla_tuple %s17, %s18
  %s20 = sld [smem:[#allocation0]]
  $region109: #{transformer_encoder_layer.1} parent=0
    _
  %s22 = ssub.s32 1, %s20
  %s23 = scalar_select 0, %s22, %s20
  $region1: #{transformer_encoder_layer.1} parent=0
    #allocation2 [shape = 'u8[8192]{0}', space=vmem, size = 0x2000, scoped, tag = 'output window, operand 1']
    #allocation3 [shape = 's32[2]{0}', space=sflag, size = 0x8, scoped, tag = 'scoped memory for transformer_encoder_layer.1']
    %24 = vsyncpa [#allocation3], 0
    %s25 = scalar_lea.sflag [#allocation3], 1
    %26 = vsyncpa %s25, 0
    loop: start=0, step=1, limit=4
    $region2: #{transformer_encoder_layer.1} parent=1 // loop_pre_header
      _
    $region3: #{transformer_encoder_layer.1} parent=1 // loop_header
      %s28 = sphi 0, %s32
      %p29 = scmp.ge.s32.totalorder %s28, 4
      %s38 = sphi 0, %s40
      %s41 = sphi 0, %s38
      %s42 = sphi 0, %s41
      %s58 = sphi 0, %s42
      %s62 = sphi 0, %s62
      %s64 = sphi 0, %s62
      %s65 = sphi 0, %s64
      %s79 = sphi 0, %s65
      %s83 = sphi 0, %s83
      %s85 = sphi 0, %s83
      %s86 = sphi 0, %s85
      %s100 = sphi 0, %s86
      %s104 = sphi 0, %s104
      %s106 = sphi 0, %s104
      %s107 = sphi 0, %s106
      %s121 = sphi 0, %s107
      %s125 = sphi 0, %s125
      %s127 = sphi 0, %s125
      %s128 = sphi 0, %s127
      %s142 = sphi 0, %s128
      %s146 = sphi 0, %s146
      %s148 = sphi 0, %s146
      %s149 = sphi 0, %s148
      %s163 = sphi 0, %s149
      %s167 = sphi 0, %s167
      %s169 = sphi 0, %s167
      %s170 = sphi 0, %s169
      %s184 = sphi 0, %s170
      %s188 = sphi 0, %s188
      %s190 = sphi 0, %s188
      %s191 = sphi 0, %s190
      %s205 = sphi 0, %s191
      %s209 = sphi 0, %s209
      %s211 = sphi 0, %s209
      %s212 = sphi 0, %s211
      %s226 = sphi 0, %s212
      %s230 = sphi 0, %s230
      %s232 = sphi 0, %s230
      %s233 = sphi 0, %s232
      %s247 = sphi 0, %s233
      %s251 = sphi 0, %s251
      %s253 = sphi 0, %s251
      %s254 = sphi 0, %s253
      %s268 = sphi 0, %s254
      %s272 = sphi 0, %s272
      %s274 = sphi 0, %s272
      %s275 = sphi 0, %s274
      %s289 = sphi 0, %s275
      %s293 = sphi 0, %s293
      %s295 = sphi 0, %s293
      %s296 = sphi 0, %s295
      %s310 = sphi 0, %s296
      %s314 = sphi 0, %s314
      %s316 = sphi 0, %s314
      %s317 = sphi 0, %s316
      %s331 = sphi 0, %s317
      %s335 = sphi 0, %s335
      %s337 = sphi 0, %s335
      %s338 = sphi 0, %s337
      %s352 = sphi 0, %s338
      %s356 = sphi 0, %s356
      %s358 = sphi 0, %s356
      %s359 = sphi 0, %s358
      %s373 = sphi 0, %s359
      %s377 = sphi 0, %s377
      %s379 = sphi 0, %s377
      %s380 = sphi 0, %s379
      %s394 = sphi 0, %s380
      %s400 = sphi 0, %s402
      %s403 = sphi 0, %s400
      %s404 = sphi 0, %s403
      %s420 = sphi 0, %s404
      %s426 = sphi 0, %s428
      %s429 = sphi 0, %s426
      %s430 = sphi 0, %s429
      %s446 = sphi 0, %s430
    $region4: #{transformer_encoder_layer.1} parent=1 // loop_header_branch
      %31 = sbr.rel (%p29) target = $region8
    $region5: #{transformer_encoder_layer.1} parent=1 // loop_body
      %s33 = ssub.s32 %s28, 1
      %s34 = ssub.s32 %s28, 2
      %s35 = sadd.s32 %s28, 1
      %s36 = ssub.s32 %s28, %s35
      %p37 = scmp.eq.s32.totalorder %s36, 0
      %s39 = sadd.s32 %s38, 1
      %s40 = scalar_select %p37, %s38, %s39
      %p43 = pneg %p37
      %p44 = scmp.eq.s32.totalorder %s28, 1
      %p45 = por %p43, %p44
      %p46 = scmp.ne.s32.totalorder %s38, %s41
      %p47 = scmp.eq.s32.totalorder %s28, 0
      %p48 = por %p46, %p47
      %p49 = scmp.ne.s32.totalorder %s38, %s41
      %p50 = scmp.eq.s32.totalorder %s33, 1
      %p51 = por %p49, %p50
      %p52 = scmp.ne.s32.totalorder %s41, %s42
      %p53 = scmp.eq.s32.totalorder %s33, 0
      %p54 = por %p52, %p53
      %p55 = scmp.ne.s32.totalorder %s41, %s42
      %p56 = scmp.eq.s32.totalorder %s34, 1
      %p57 = por %p55, %p56
      %p59 = scmp.ne.s32.totalorder %s42, %s58
      %p60 = scmp.eq.s32.totalorder %s34, 0
      %p61 = por %p59, %p60
      %s63 = sadd.s32 %s62, 1
      %p66 = scmp.eq.s32.totalorder %s28, 1
      %p67 = scmp.ne.s32.totalorder %s62, %s64
      %p68 = scmp.eq.s32.totalorder %s28, 0
      %p69 = por %p67, %p68
      %p70 = scmp.ne.s32.totalorder %s62, %s64
      %p71 = scmp.eq.s32.totalorder %s33, 1
      %p72 = por %p70, %p71
      %p73 = scmp.ne.s32.totalorder %s64, %s65
      %p74 = scmp.eq.s32.totalorder %s33, 0
      %p75 = por %p73, %p74
      %p76 = scmp.ne.s32.totalorder %s64, %s65
      %p77 = scmp.eq.s32.totalorder %s34, 1
      %p78 = por %p76, %p77
      %p80 = scmp.ne.s32.totalorder %s65, %s79
      %p81 = scmp.eq.s32.totalorder %s34, 0
      %p82 = por %p80, %p81
      %s84 = sadd.s32 %s83, 1
      %p87 = scmp.eq.s32.totalorder %s28, 1
      %p88 = scmp.ne.s32.totalorder %s83, %s85
      %p89 = scmp.eq.s32.totalorder %s28, 0
      %p90 = por %p88, %p89
      %p91 = scmp.ne.s32.totalorder %s83, %s85
      %p92 = scmp.eq.s32.totalorder %s33, 1
      %p93 = por %p91, %p92
      %p94 = scmp.ne.s32.totalorder %s85, %s86
      %p95 = scmp.eq.s32.totalorder %s33, 0
      %p96 = por %p94, %p95
      %p97 = scmp.ne.s32.totalorder %s85, %s86
      %p98 = scmp.eq.s32.totalorder %s34, 1
      %p99 = por %p97, %p98
      %p101 = scmp.ne.s32.totalorder %s86, %s100
      %p102 = scmp.eq.s32.totalorder %s34, 0
      %p103 = por %p101, %p102
      %s105 = sadd.s32 %s104, 1
      %p108 = scmp.eq.s32.totalorder %s28, 1
      %p109 = scmp.ne.s32.totalorder %s104, %s106
      %p110 = scmp.eq.s32.totalorder %s28, 0
      %p111 = por %p109, %p110
      %p112 = scmp.ne.s32.totalorder %s104, %s106
      %p113 = scmp.eq.s32.totalorder %s33, 1
      %p114 = por %p112, %p113
      %p115 = scmp.ne.s32.totalorder %s106, %s107
      %p116 = scmp.eq.s32.totalorder %s33, 0
      %p117 = por %p115, %p116
      %p118 = scmp.ne.s32.totalorder %s106, %s107
      %p119 = scmp.eq.s32.totalorder %s34, 1
      %p120 = por %p118, %p119
      %p122 = scmp.ne.s32.totalorder %s107, %s121
      %p123 = scmp.eq.s32.totalorder %s34, 0
      %p124 = por %p122, %p123
      %s126 = sadd.s32 %s125, 1
      %p129 = scmp.eq.s32.totalorder %s28, 1
      %p130 = scmp.ne.s32.totalorder %s125, %s127
      %p131 = scmp.eq.s32.totalorder %s28, 0
      %p132 = por %p130, %p131
      %p133 = scmp.ne.s32.totalorder %s125, %s127
      %p134 = scmp.eq.s32.totalorder %s33, 1
      %p135 = por %p133, %p134
      %p136 = scmp.ne.s32.totalorder %s127, %s128
      %p137 = scmp.eq.s32.totalorder %s33, 0
      %p138 = por %p136, %p137
      %p139 = scmp.ne.s32.totalorder %s127, %s128
      %p140 = scmp.eq.s32.totalorder %s34, 1
      %p141 = por %p139, %p140
      %p143 = scmp.ne.s32.totalorder %s128, %s142
      %p144 = scmp.eq.s32.totalorder %s34, 0
      %p145 = por %p143, %p144
      %s147 = sadd.s32 %s146, 1
      %p150 = scmp.eq.s32.totalorder %s28, 1
      %p151 = scmp.ne.s32.totalorder %s146, %s148
      %p152 = scmp.eq.s32.totalorder %s28, 0
      %p153 = por %p151, %p152
      %p154 = scmp.ne.s32.totalorder %s146, %s148
      %p155 = scmp.eq.s32.totalorder %s33, 1
      %p156 = por %p154, %p155
      %p157 = scmp.ne.s32.totalorder %s148, %s149
      %p158 = scmp.eq.s32.totalorder %s33, 0
      %p159 = por %p157, %p158
      %p160 = scmp.ne.s32.totalorder %s148, %s149
      %p161 = scmp.eq.s32.totalorder %s34, 1
      %p162 = por %p160, %p161
      %p164 = scmp.ne.s32.totalorder %s149, %s163
      %p165 = scmp.eq.s32.totalorder %s34, 0
      %p166 = por %p164, %p165
      %s168 = sadd.s32 %s167, 1
      %p171 = scmp.eq.s32.totalorder %s28, 1
      %p172 = scmp.ne.s32.totalorder %s167, %s169
      %p173 = scmp.eq.s32.totalorder %s28, 0
      %p174 = por %p172, %p173
      %p175 = scmp.ne.s32.totalorder %s167, %s169
      %p176 = scmp.eq.s32.totalorder %s33, 1
      %p177 = por %p175, %p176
      %p178 = scmp.ne.s32.totalorder %s169, %s170
      %p179 = scmp.eq.s32.totalorder %s33, 0
      %p180 = por %p178, %p179
      %p181 = scmp.ne.s32.totalorder %s169, %s170
      %p182 = scmp.eq.s32.totalorder %s34, 1
      %p183 = por %p181, %p182
      %p185 = scmp.ne.s32.totalorder %s170, %s184
      %p186 = scmp.eq.s32.totalorder %s34, 0
      %p187 = por %p185, %p186
      %s189 = sadd.s32 %s188, 1
      %p192 = scmp.eq.s32.totalorder %s28, 1
      %p193 = scmp.ne.s32.totalorder %s188, %s190
      %p194 = scmp.eq.s32.totalorder %s28, 0
      %p195 = por %p193, %p194
      %p196 = scmp.ne.s32.totalorder %s188, %s190
      %p197 = scmp.eq.s32.totalorder %s33, 1
      %p198 = por %p196, %p197
      %p199 = scmp.ne.s32.totalorder %s190, %s191
      %p200 = scmp.eq.s32.totalorder %s33, 0
      %p201 = por %p199, %p200
      %p202 = scmp.ne.s32.totalorder %s190, %s191
      %p203 = scmp.eq.s32.totalorder %s34, 1
      %p204 = por %p202, %p203
      %p206 = scmp.ne.s32.totalorder %s191, %s205
      %p207 = scmp.eq.s32.totalorder %s34, 0
      %p208 = por %p206, %p207
      %s210 = sadd.s32 %s209, 1
      %p213 = scmp.eq.s32.totalorder %s28, 1
      %p214 = scmp.ne.s32.totalorder %s209, %s211
      %p215 = scmp.eq.s32.totalorder %s28, 0
      %p216 = por %p214, %p215
      %p217 = scmp.ne.s32.totalorder %s209, %s211
      %p218 = scmp.eq.s32.totalorder %s33, 1
      %p219 = por %p217, %p218
      %p220 = scmp.ne.s32.totalorder %s211, %s212
      %p221 = scmp.eq.s32.totalorder %s33, 0
      %p222 = por %p220, %p221
      %p223 = scmp.ne.s32.totalorder %s211, %s212
      %p224 = scmp.eq.s32.totalorder %s34, 1
      %p225 = por %p223, %p224
      %p227 = scmp.ne.s32.totalorder %s212, %s226
      %p228 = scmp.eq.s32.totalorder %s34, 0
      %p229 = por %p227, %p228
      %s231 = sadd.s32 %s230, 1
      %p234 = scmp.eq.s32.totalorder %s28, 1
      %p235 = scmp.ne.s32.totalorder %s230, %s232
      %p236 = scmp.eq.s32.totalorder %s28, 0
      %p237 = por %p235, %p236
      %p238 = scmp.ne.s32.totalorder %s230, %s232
      %p239 = scmp.eq.s32.totalorder %s33, 1
      %p240 = por %p238, %p239
      %p241 = scmp.ne.s32.totalorder %s232, %s233
      %p242 = scmp.eq.s32.totalorder %s33, 0
      %p243 = por %p241, %p242
      %p244 = scmp.ne.s32.totalorder %s232, %s233
      %p245 = scmp.eq.s32.totalorder %s34, 1
      %p246 = por %p244, %p245
      %p248 = scmp.ne.s32.totalorder %s233, %s247
      %p249 = scmp.eq.s32.totalorder %s34, 0
      %p250 = por %p248, %p249
      %s252 = sadd.s32 %s251, 1
      %p255 = scmp.eq.s32.totalorder %s28, 1
      %p256 = scmp.ne.s32.totalorder %s251, %s253
      %p257 = scmp.eq.s32.totalorder %s28, 0
      %p258 = por %p256, %p257
      %p259 = scmp.ne.s32.totalorder %s251, %s253
      %p260 = scmp.eq.s32.totalorder %s33, 1
      %p261 = por %p259, %p260
      %p262 = scmp.ne.s32.totalorder %s253, %s254
      %p263 = scmp.eq.s32.totalorder %s33, 0
      %p264 = por %p262, %p263
      %p265 = scmp.ne.s32.totalorder %s253, %s254
      %p266 = scmp.eq.s32.totalorder %s34, 1
      %p267 = por %p265, %p266
      %p269 = scmp.ne.s32.totalorder %s254, %s268
      %p270 = scmp.eq.s32.totalorder %s34, 0
      %p271 = por %p269, %p270
      %s273 = sadd.s32 %s272, 1
      %p276 = scmp.eq.s32.totalorder %s28, 1
      %p277 = scmp.ne.s32.totalorder %s272, %s274
      %p278 = scmp.eq.s32.totalorder %s28, 0
      %p279 = por %p277, %p278
      %p280 = scmp.ne.s32.totalorder %s272, %s274
      %p281 = scmp.eq.s32.totalorder %s33, 1
      %p282 = por %p280, %p281
      %p283 = scmp.ne.s32.totalorder %s274, %s275
      %p284 = scmp.eq.s32.totalorder %s33, 0
      %p285 = por %p283, %p284
      %p286 = scmp.ne.s32.totalorder %s274, %s275
      %p287 = scmp.eq.s32.totalorder %s34, 1
      %p288 = por %p286, %p287
      %p290 = scmp.ne.s32.totalorder %s275, %s289
      %p291 = scmp.eq.s32.totalorder %s34, 0
      %p292 = por %p290, %p291
      %s294 = sadd.s32 %s293, 1
      %p297 = scmp.eq.s32.totalorder %s28, 1
      %p298 = scmp.ne.s32.totalorder %s293, %s295
      %p299 = scmp.eq.s32.totalorder %s28, 0
      %p300 = por %p298, %p299
      %p301 = scmp.ne.s32.totalorder %s293, %s295
      %p302 = scmp.eq.s32.totalorder %s33, 1
      %p303 = por %p301, %p302
      %p304 = scmp.ne.s32.totalorder %s295, %s296
      %p305 = scmp.eq.s32.totalorder %s33, 0
      %p306 = por %p304, %p305
      %p307 = scmp.ne.s32.totalorder %s295, %s296
      %p308 = scmp.eq.s32.totalorder %s34, 1
      %p309 = por %p307, %p308
      %p311 = scmp.ne.s32.totalorder %s296, %s310
      %p312 = scmp.eq.s32.totalorder %s34, 0
      %p313 = por %p311, %p312
      %s315 = sadd.s32 %s314, 1
      %p318 = scmp.eq.s32.totalorder %s28, 1
      %p319 = scmp.ne.s32.totalorder %s314, %s316
      %p320 = scmp.eq.s32.totalorder %s28, 0
      %p321 = por %p319, %p320
      %p322 = scmp.ne.s32.totalorder %s314, %s316
      %p323 = scmp.eq.s32.totalorder %s33, 1
      %p324 = por %p322, %p323
      %p325 = scmp.ne.s32.totalorder %s316, %s317
      %p326 = scmp.eq.s32.totalorder %s33, 0
      %p327 = por %p325, %p326
      %p328 = scmp.ne.s32.totalorder %s316, %s317
      %p329 = scmp.eq.s32.totalorder %s34, 1
      %p330 = por %p328, %p329
      %p332 = scmp.ne.s32.totalorder %s317, %s331
      %p333 = scmp.eq.s32.totalorder %s34, 0
      %p334 = por %p332, %p333
      %s336 = sadd.s32 %s335, 1
      %p339 = scmp.eq.s32.totalorder %s28, 1
      %p340 = scmp.ne.s32.totalorder %s335, %s337
      %p341 = scmp.eq.s32.totalorder %s28, 0
      %p342 = por %p340, %p341
      %p343 = scmp.ne.s32.totalorder %s335, %s337
      %p344 = scmp.eq.s32.totalorder %s33, 1
      %p345 = por %p343, %p344
      %p346 = scmp.ne.s32.totalorder %s337, %s338
      %p347 = scmp.eq.s32.totalorder %s33, 0
      %p348 = por %p346, %p347
      %p349 = scmp.ne.s32.totalorder %s337, %s338
      %p350 = scmp.eq.s32.totalorder %s34, 1
      %p351 = por %p349, %p350
      %p353 = scmp.ne.s32.totalorder %s338, %s352
      %p354 = scmp.eq.s32.totalorder %s34, 0
      %p355 = por %p353, %p354
      %s357 = sadd.s32 %s356, 1
      %p360 = scmp.eq.s32.totalorder %s28, 1
      %p361 = scmp.ne.s32.totalorder %s356, %s358
      %p362 = scmp.eq.s32.totalorder %s28, 0
      %p363 = por %p361, %p362
      %p364 = scmp.ne.s32.totalorder %s356, %s358
      %p365 = scmp.eq.s32.totalorder %s33, 1
      %p366 = por %p364, %p365
      %p367 = scmp.ne.s32.totalorder %s358, %s359
      %p368 = scmp.eq.s32.totalorder %s33, 0
      %p369 = por %p367, %p368
      %p370 = scmp.ne.s32.totalorder %s358, %s359
      %p371 = scmp.eq.s32.totalorder %s34, 1
      %p372 = por %p370, %p371
      %p374 = scmp.ne.s32.totalorder %s359, %s373
      %p375 = scmp.eq.s32.totalorder %s34, 0
      %p376 = por %p374, %p375
      %s378 = sadd.s32 %s377, 1
      %p381 = scmp.eq.s32.totalorder %s28, 1
      %p382 = scmp.ne.s32.totalorder %s377, %s379
      %p383 = scmp.eq.s32.totalorder %s28, 0
      %p384 = por %p382, %p383
      %p385 = scmp.ne.s32.totalorder %s377, %s379
      %p386 = scmp.eq.s32.totalorder %s33, 1
      %p387 = por %p385, %p386
      %p388 = scmp.ne.s32.totalorder %s379, %s380
      %p389 = scmp.eq.s32.totalorder %s33, 0
      %p390 = por %p388, %p389
      %p391 = scmp.ne.s32.totalorder %s379, %s380
      %p392 = scmp.eq.s32.totalorder %s34, 1
      %p393 = por %p391, %p392
      %p395 = scmp.ne.s32.totalorder %s380, %s394
      %p396 = scmp.eq.s32.totalorder %s34, 0
      %p397 = por %p395, %p396
      %s398 = ssub.s32 %s28, %s35
      %p399 = scmp.eq.s32.totalorder %s398, 0
      %s401 = sadd.s32 %s400, 1
      %s402 = scalar_select %p399, %s400, %s401
      %p405 = pneg %p399
      %p406 = scmp.eq.s32.totalorder %s28, 1
      %p407 = por %p405, %p406
      %p408 = scmp.ne.s32.totalorder %s400, %s403
      %p409 = scmp.eq.s32.totalorder %s28, 0
      %p410 = por %p408, %p409
      %p411 = scmp.ne.s32.totalorder %s400, %s403
      %p412 = scmp.eq.s32.totalorder %s33, 1
      %p413 = por %p411, %p412
      %p414 = scmp.ne.s32.totalorder %s403, %s404
      %p415 = scmp.eq.s32.totalorder %s33, 0
      %p416 = por %p414, %p415
      %p417 = scmp.ne.s32.totalorder %s403, %s404
      %p418 = scmp.eq.s32.totalorder %s34, 1
      %p419 = por %p417, %p418
      %p421 = scmp.ne.s32.totalorder %s404, %s420
      %p422 = scmp.eq.s32.totalorder %s34, 0
      %p423 = por %p421, %p422
      %s424 = ssub.s32 %s28, %s35
      %p425 = scmp.eq.s32.totalorder %s424, 0
      %s427 = sadd.s32 %s426, 1
      %s428 = scalar_select %p425, %s426, %s427
      %p431 = pneg %p425
      %p432 = scmp.eq.s32.totalorder %s28, 1
      %p433 = por %p431, %p432
      %p434 = scmp.ne.s32.totalorder %s426, %s429
      %p435 = scmp.eq.s32.totalorder %s28, 0
      %p436 = por %p434, %p435
      %p437 = scmp.ne.s32.totalorder %s426, %s429
      %p438 = scmp.eq.s32.totalorder %s33, 1
      %p439 = por %p437, %p438
      %p440 = scmp.ne.s32.totalorder %s429, %s430
      %p441 = scmp.eq.s32.totalorder %s33, 0
      %p442 = por %p440, %p441
      %p443 = scmp.ne.s32.totalorder %s429, %s430
      %p444 = scmp.eq.s32.totalorder %s34, 1
      %p445 = por %p443, %p444
      %p447 = scmp.ne.s32.totalorder %s430, %s446
      %p448 = scmp.eq.s32.totalorder %s34, 0
      %p449 = por %p447, %p448
      %p450 = scmp.le.s32.totalorder 1, %s28
      %p451 = scmp.lt.s32.totalorder %s28, 3
      %p452 = pnand %p450, %p451
      %p453 = pneg %p452
      // Predicated region
      $region9: #{transformer_encoder_layer.1} parent=5 // pred_check
        _
      $region10: #{transformer_encoder_layer.1} parent=5 // pred_check_branch
        %455 = sbr.rel (%p452) target = $region12
      $region11: #{transformer_encoder_layer.1} parent=5 // pred_region
        %s456 = ssub.s32 %s28, 1
        // Predicated region
        $region13: #{transformer_encoder_layer.1} parent=11 // pred_check
          %p457 = pneg %p75
        $region14: #{transformer_encoder_layer.1} parent=11 // pred_check_branch
          %459 = sbr.rel (%p457) target = $region16
        $region15: #{transformer_encoder_layer.1} parent=11 // pred_region
          _
        $region16: #{transformer_encoder_layer.1} parent=11 // pred_fallthru
          _
        // Predicated region
        $region17: #{transformer_encoder_layer.1} parent=11 // pred_check
          %p460 = pneg %p96
        $region18: #{transformer_encoder_layer.1} parent=11 // pred_check_branch
          %462 = sbr.rel (%p460) target = $region20
        $region19: #{transformer_encoder_layer.1} parent=11 // pred_region
          _
        $region20: #{transformer_encoder_layer.1} parent=11 // pred_fallthru
          _
        // Predicated region
        $region21: #{transformer_encoder_layer.1} parent=11 // pred_check
          %p463 = pneg %p117
        $region22: #{transformer_encoder_layer.1} parent=11 // pred_check_branch
          %465 = sbr.rel (%p463) target = $region24
        $region23: #{transformer_encoder_layer.1} parent=11 // pred_region
          _
        $region24: #{transformer_encoder_layer.1} parent=11 // pred_fallthru
          _
        // Predicated region
        $region25: #{transformer_encoder_layer.1} parent=11 // pred_check
          %p466 = pneg %p138
        $region26: #{transformer_encoder_layer.1} parent=11 // pred_check_branch
          %468 = sbr.rel (%p466) target = $region28
        $region27: #{transformer_encoder_layer.1} parent=11 // pred_region
          _
        $region28: #{transformer_encoder_layer.1} parent=11 // pred_fallthru
          _
        // Predicated region
        $region29: #{transformer_encoder_layer.1} parent=11 // pred_check
          %p469 = pneg %p159
        $region30: #{transformer_encoder_layer.1} parent=11 // pred_check_branch
          %471 = sbr.rel (%p469) target = $region32
        $region31: #{transformer_encoder_layer.1} parent=11 // pred_region
          _
        $region32: #{transformer_encoder_layer.1} parent=11 // pred_fallthru
          _
        // Predicated region
        $region33: #{transformer_encoder_layer.1} parent=11 // pred_check
          %p472 = pneg %p180
        $region34: #{transformer_encoder_layer.1} parent=11 // pred_check_branch
          %474 = sbr.rel (%p472) target = $region36
        $region35: #{transformer_encoder_layer.1} parent=11 // pred_region
          _
        $region36: #{transformer_encoder_layer.1} parent=11 // pred_fallthru
          _
        // Predicated region
        $region37: #{transformer_encoder_layer.1} parent=11 // pred_check
          %p475 = pneg %p201
        $region38: #{transformer_encoder_layer.1} parent=11 // pred_check_branch
          %477 = sbr.rel (%p475) target = $region40
        $region39: #{transformer_encoder_layer.1} parent=11 // pred_region
          _
        $region40: #{transformer_encoder_layer.1} parent=11 // pred_fallthru
          _
        // Predicated region
        $region41: #{transformer_encoder_layer.1} parent=11 // pred_check
          %p478 = pneg %p222
        $region42: #{transformer_encoder_layer.1} parent=11 // pred_check_branch
          %480 = sbr.rel (%p478) target = $region44
        $region43: #{transformer_encoder_layer.1} parent=11 // pred_region
          _
        $region44: #{transformer_encoder_layer.1} parent=11 // pred_fallthru
          _
        // Predicated region
        $region45: #{transformer_encoder_layer.1} parent=11 // pred_check
          %p481 = pneg %p243
        $region46: #{transformer_encoder_layer.1} parent=11 // pred_check_branch
          %483 = sbr.rel (%p481) target = $region48
        $region47: #{transformer_encoder_layer.1} parent=11 // pred_region
          _
        $region48: #{transformer_encoder_layer.1} parent=11 // pred_fallthru
          _
        // Predicated region
        $region49: #{transformer_encoder_layer.1} parent=11 // pred_check
          %p484 = pneg %p264
        $region50: #{transformer_encoder_layer.1} parent=11 // pred_check_branch
          %486 = sbr.rel (%p484) target = $region52
        $region51: #{transformer_encoder_layer.1} parent=11 // pred_region
          _
        $region52: #{transformer_encoder_layer.1} parent=11 // pred_fallthru
          _
        // Predicated region
        $region53: #{transformer_encoder_layer.1} parent=11 // pred_check
          %p487 = pneg %p285
        $region54: #{transformer_encoder_layer.1} parent=11 // pred_check_branch
          %489 = sbr.rel (%p487) target = $region56
        $region55: #{transformer_encoder_layer.1} parent=11 // pred_region
          _
        $region56: #{transformer_encoder_layer.1} parent=11 // pred_fallthru
          _
        // Predicated region
        $region57: #{transformer_encoder_layer.1} parent=11 // pred_check
          %p490 = pneg %p306
        $region58: #{transformer_encoder_layer.1} parent=11 // pred_check_branch
          %492 = sbr.rel (%p490) target = $region60
        $region59: #{transformer_encoder_layer.1} parent=11 // pred_region
          _
        $region60: #{transformer_encoder_layer.1} parent=11 // pred_fallthru
          _
        // Predicated region
        $region61: #{transformer_encoder_layer.1} parent=11 // pred_check
          %p493 = pneg %p327
        $region62: #{transformer_encoder_layer.1} parent=11 // pred_check_branch
          %495 = sbr.rel (%p493) target = $region64
        $region63: #{transformer_encoder_layer.1} parent=11 // pred_region
          _
        $region64: #{transformer_encoder_layer.1} parent=11 // pred_fallthru
          _
        // Predicated region
        $region65: #{transformer_encoder_layer.1} parent=11 // pred_check
          %p496 = pneg %p348
        $region66: #{transformer_encoder_layer.1} parent=11 // pred_check_branch
          %498 = sbr.rel (%p496) target = $region68
        $region67: #{transformer_encoder_layer.1} parent=11 // pred_region
          _
        $region68: #{transformer_encoder_layer.1} parent=11 // pred_fallthru
          _
        // Predicated region
        $region69: #{transformer_encoder_layer.1} parent=11 // pred_check
          %p499 = pneg %p369
        $region70: #{transformer_encoder_layer.1} parent=11 // pred_check_branch
          %501 = sbr.rel (%p499) target = $region72
        $region71: #{transformer_encoder_layer.1} parent=11 // pred_region
          _
        $region72: #{transformer_encoder_layer.1} parent=11 // pred_fallthru
          _
        // Predicated region
        $region73: #{transformer_encoder_layer.1} parent=11 // pred_check
          %p502 = pneg %p390
        $region74: #{transformer_encoder_layer.1} parent=11 // pred_check_branch
          %504 = sbr.rel (%p502) target = $region76
        $region75: #{transformer_encoder_layer.1} parent=11 // pred_region
          _
        $region76: #{transformer_encoder_layer.1} parent=11 // pred_fallthru
          _
      $region12: #{transformer_encoder_layer.1} parent=5 // pred_fallthru
        _
      %p505 = scmp.lt.s32.totalorder %s28, 2
      // Predicated region
      $region77: #{transformer_encoder_layer.1} parent=5 // pred_check
        %p506 = pneg %p505
      $region78: #{transformer_encoder_layer.1} parent=5 // pred_check_branch
        %508 = sbr.rel (%p506) target = $region80
      $region79: #{transformer_encoder_layer.1} parent=5 // pred_region
        // Predicated region
        $region81: #{transformer_encoder_layer.1} parent=79 // pred_check
          %p509 = pneg %p48
        $region82: #{transformer_encoder_layer.1} parent=79 // pred_check_branch
          %511 = sbr.rel (%p509) target = $region84
        $region83: #{transformer_encoder_layer.1} parent=79 // pred_region
          %p512 = scmp.lt.s32.totalorder %s28, 1
          %s513 = scalar_select %p512, %s28, 1
          %s514 = smul.addr %s513, 8
          %s515 = scalar_lea.vmem %s0, %s514
        $region84: #{transformer_encoder_layer.1} parent=79 // pred_fallthru
          _
      $region80: #{transformer_encoder_layer.1} parent=5 // pred_fallthru
        _
      %p516 = scmp.le.s32.totalorder 1, %s28
      %p517 = scmp.lt.s32.totalorder %s28, 3
      %p518 = pnand %p516, %p517
      %p519 = pneg %p518
      // Predicated region
      $region85: #{transformer_encoder_layer.1} parent=5 // pred_check
        _
      $region86: #{transformer_encoder_layer.1} parent=5 // pred_check_branch
        %521 = sbr.rel (%p518) target = $region88
      $region87: #{transformer_encoder_layer.1} parent=5 // pred_region
        %s522 = ssub.s32 %s28, 1
        %p523 = scmp.lt.s32.totalorder %s33, 1
        %s524 = scalar_select %p523, %s33, 1
        %s525 = smul.addr %s524, 8
        %s526 = scalar_lea.vmem %s0, %s525
        %p527 = pneg %p54
        %p528 = pneg %p51
        %p529 = pneg %p75
        %p530 = pneg %p72
        %p531 = pneg %p96
        %p532 = pneg %p93
        %p533 = pneg %p117
        %p534 = pneg %p114
        %p535 = pneg %p138
        %p536 = pneg %p135
        %p537 = pneg %p159
        %p538 = pneg %p156
        %p539 = pneg %p180
        %p540 = pneg %p177
        %p541 = pneg %p201
        %p542 = pneg %p198
        %p543 = pneg %p222
        %p544 = pneg %p219
        %p545 = pneg %p243
        %p546 = pneg %p240
        %p547 = pneg %p264
        %p548 = pneg %p261
        %p549 = pneg %p285
        %p550 = pneg %p282
        %p551 = pneg %p306
        %p552 = pneg %p303
        %p553 = pneg %p327
        %p554 = pneg %p324
        %p555 = pneg %p348
        %p556 = pneg %p345
        %p557 = pneg %p369
        %p558 = pneg %p366
        %p559 = pneg %p390
        %p560 = pneg %p387
        %p561 = pneg %p416
        %p562 = pneg %p413
        %p563 = scmp.lt.s32.totalorder %s33, 1
        %s564 = scalar_select %p563, %s33, 1
        %s565 = smul.addr %s564, 8
        %s566 = scalar_lea.vmem %s17, %s565
        %p567 = pneg %p442
        %p568 = pneg %p439
        %s569 = sand.u32 %s429, 1
        %s570 = scalar_lea.sflag [#allocation3], %s569
        %s571 = sand.u32 %s429, 1
        %s572 = smul.addr %s571, 8
        %s573 = scalar_lea.vmem [#allocation2], %s572
        %p574 = scmp.lt.s32.totalorder %s33, 1
        %s575 = scalar_select %p574, %s33, 1
        %s576 = smul.addr %s575, 8
        %s577 = scalar_lea.vmem %s0, %s576
        %p578 = scmp.lt.s32.totalorder %s33, 1
        %s579 = scalar_select %p578, %s33, 1
        %s580 = smul.addr %s579, 8
        %s581 = scalar_lea.vmem %s17, %s580
        %v583 = vld [vmem:[%s577] sm:$0xff]
        %v584 = vld [vmem:[%s13] sm:$0x1]
        %v585 = vld [vmem:[%s14] sm:$0x1]
        %vm586 = vcmask 261120
        %v587 = vsel %vm586, %v583, 0.0
        %588 = vadd.xlane.f32.xlu0 %v587
        %v589 = vpop.xlane.xlu0 %588
        %v590 = vrcp.pop 32.0
        %v591 = vmul.f32 %v589, %v590
        %v592 = vsub.f32 %v583, %v591
        %v593 = vmul.f32 %v592, %v592
        %v594 = vsel %vm586, %v593, 0.0
        %595 = vadd.xlane.f32.xlu0 %v594
        %v596 = vpop.xlane.xlu0 %595
        %v597 = vmul.f32 %v596, %v590
        %v598 = vadd.f32 %v597, 1e-05
        %v599 = vrsqrt.pop %v598
        %v600 = vmul.f32 %v592, %v599
        %v602 = vlaneseq
        %v603 = vshrl.u32 %v602, 7
        %v604 = vsub.s32 0, %v603
        %v605 = vrot.slane %v584, %v604
        %v607 = vmul.f32 %v600, %v605
        %v609 = vlaneseq
        %v610 = vshrl.u32 %v609, 7
        %v611 = vsub.s32 0, %v610
        %v612 = vrot.slane %v585, %v611
        %v614 = vadd.f32 %v607, %v612
        %v615 = vpack.c.bf16 %v614, %v614
        %v616 = vld [vmem:[%s1] sm:$0xf]
        %v617 = vld [vmem:[%s1 + $0x4] sm:$0xf]
        %v618 = vld [vmem:[%s1 + $0x8] sm:$0xf]
        %v619 = vld [vmem:[%s1 + $0xc] sm:$0xf]
        %v620 = vld [vmem:[%s4] sm:$0x1]
        %v622 = vlaneseq
        %v623 = vshrl.u32 %v622, 7
        %v624 = vsub.s32 0, %v623
        %v625 = vrot.slane %v620, %v624
        %v631 = vunpack.c.l.b16 %v616
        %v632 = vunpack.c.l.b16 %v617
        %v633 = vunpack.c.l.b16 %v618
        %v634 = vunpack.c.l.b16 %v619
        %v635 = vpack.c.b16 %v632, %v631
        %v636 = vpack.c.b16 %v634, %v633
        %v640 = vsel %vm586, %v615, 0
        %642 = vmatprep.subr.bf16.mxu0 0
        %643 = vmatpush1.bf16.msra.mxu0 %v635
        %644 = vmatprep.subr.bf16.mxu0 0
        %645 = vmatpush1.bf16.msra.mxu0 %v636
        %646 = vmatprep.subr.bf16.mxu0 0
        %647 = vmatpush1.bf16.msra.mxu0 0
        %648 = vmatprep.subr.bf16.mxu0 0
        %649 = vmatpush1.bf16.msra.mxu0 0
        %650 = vmatprep.subr.bf16.mxu0 0
        %651 = vmatpush1.bf16.msra.mxu0 0
        %652 = vmatprep.subr.bf16.mxu0 0
        %653 = vmatpush1.bf16.msra.mxu0 0
        %654 = vmatprep.subr.bf16.mxu0 0
        %655 = vmatpush1.bf16.msra.mxu0 0
        %656 = vmatprep.subr.bf16.mxu0 0
        %657 = vmatpush1.bf16.msra.mxu0 0
        %658 = vmatprep.subr.bf16.mxu0 0
        %659 = vmatpush1.bf16.msra.mxu0 0
        %660 = vmatprep.subr.bf16.mxu0 0
        %661 = vmatpush1.bf16.msra.mxu0 0
        %662 = vmatprep.subr.bf16.mxu0 0
        %663 = vmatpush1.bf16.msra.mxu0 0
        %664 = vmatprep.subr.bf16.mxu0 0
        %665 = vmatpush1.bf16.msra.mxu0 0
        %666 = vmatprep.subr.bf16.mxu0 0
        %667 = vmatpush1.bf16.msra.mxu0 0
        %668 = vmatprep.subr.bf16.mxu0 0
        %669 = vmatpush1.bf16.msra.mxu0 0
        %670 = vmatprep.subr.bf16.mxu0 0
        %671 = vmatpush1.bf16.msra.mxu0 0
        %672 = vmatprep.subr.bf16.mxu0 0
        %673 = vmatpush1.bf16.msra.mxu0 0
        %674 = vmatprep.mubr.bf16.mxu0 0
        %675 = vmatmul.mubr.bf16.gmra.mrb[0].mxu0 %v640
        %v676 = vpop.f32.mrb[0].mxu0
        %v677 = vadd.f32 %v625, %v676
        %v678 = vpop.f32.mrb[0].mxu0
        %v679 = vpop.f32.mrb[0].mxu0
        %v680 = vpop.f32.mrb[0].mxu0
        %681 = vdwg.mxu0
        %v682 = vld [vmem:[%s2] sm:$0xf]
        %v683 = vld [vmem:[%s2 + $0x4] sm:$0xf]
        %v684 = vld [vmem:[%s2 + $0x8] sm:$0xf]
        %v685 = vld [vmem:[%s2 + $0xc] sm:$0xf]
        %v686 = vld [vmem:[%s5] sm:$0x1]
        %v688 = vlaneseq
        %v689 = vshrl.u32 %v688, 7
        %v690 = vsub.s32 0, %v689
        %v691 = vrot.slane %v686, %v690
        %v697 = vunpack.c.l.b16 %v682
        %v698 = vunpack.c.l.b16 %v683
        %v699 = vunpack.c.l.b16 %v684
        %v700 = vunpack.c.l.b16 %v685
        %v701 = vpack.c.b16 %v698, %v697
        %v702 = vpack.c.b16 %v700, %v699
        %705 = vmatprep.subr.bf16.mxu0 0
        %706 = vmatpush1.bf16.msra.mxu0 %v701
        %707 = vmatprep.subr.bf16.mxu0 0
        %708 = vmatpush1.bf16.msra.mxu0 %v702
        %709 = vmatprep.subr.bf16.mxu0 0
        %710 = vmatpush1.bf16.msra.mxu0 0
        %711 = vmatprep.subr.bf16.mxu0 0
        %712 = vmatpush1.bf16.msra.mxu0 0
        %713 = vmatprep.subr.bf16.mxu0 0
        %714 = vmatpush1.bf16.msra.mxu0 0
        %715 = vmatprep.subr.bf16.mxu0 0
        %716 = vmatpush1.bf16.msra.mxu0 0
        %717 = vmatprep.subr.bf16.mxu0 0
        %718 = vmatpush1.bf16.msra.mxu0 0
        %719 = vmatprep.subr.bf16.mxu0 0
        %720 = vmatpush1.bf16.msra.mxu0 0
        %721 = vmatprep.subr.bf16.mxu0 0
        %722 = vmatpush1.bf16.msra.mxu0 0
        %723 = vmatprep.subr.bf16.mxu0 0
        %724 = vmatpush1.bf16.msra.mxu0 0
        %725 = vmatprep.subr.bf16.mxu0 0
        %726 = vmatpush1.bf16.msra.mxu0 0
        %727 = vmatprep.subr.bf16.mxu0 0
        %728 = vmatpush1.bf16.msra.mxu0 0
        %729 = vmatprep.subr.bf16.mxu0 0
        %730 = vmatpush1.bf16.msra.mxu0 0
        %731 = vmatprep.subr.bf16.mxu0 0
        %732 = vmatpush1.bf16.msra.mxu0 0
        %733 = vmatprep.subr.bf16.mxu0 0
        %734 = vmatpush1.bf16.msra.mxu0 0
        %735 = vmatprep.subr.bf16.mxu0 0
        %736 = vmatpush1.bf16.msra.mxu0 0
        %737 = vmatprep.mubr.bf16.mxu0 0
        %738 = vmatmul.mubr.bf16.gmra.mrb[0].mxu0 %v640
        %v739 = vpop.f32.mrb[0].mxu0
        %v740 = vadd.f32 %v691, %v739
        %v741 = vpop.f32.mrb[0].mxu0
        %v742 = vpop.f32.mrb[0].mxu0
        %v743 = vpop.f32.mrb[0].mxu0
        %744 = vdwg.mxu0
        %v745 = vld [vmem:[%s3] sm:$0xf]
        %v746 = vld [vmem:[%s3 + $0x4] sm:$0xf]
        %v747 = vld [vmem:[%s3 + $0x8] sm:$0xf]
        %v748 = vld [vmem:[%s3 + $0xc] sm:$0xf]
        %v749 = vld [vmem:[%s6] sm:$0x1]
        %v751 = vlaneseq
        %v752 = vshrl.u32 %v751, 7
        %v753 = vsub.s32 0, %v752
        %v754 = vrot.slane %v749, %v753
        %v760 = vunpack.c.l.b16 %v745
        %v761 = vunpack.c.l.b16 %v746
        %v762 = vunpack.c.l.b16 %v747
        %v763 = vunpack.c.l.b16 %v748
        %v764 = vpack.c.b16 %v761, %v760
        %v765 = vpack.c.b16 %v763, %v762
        %768 = vmatprep.subr.bf16.mxu0 0
        %769 = vmatpush1.bf16.msra.mxu0 %v764
        %770 = vmatprep.subr.bf16.mxu0 0
        %771 = vmatpush1.bf16.msra.mxu0 %v765
        %772 = vmatprep.subr.bf16.mxu0 0
        %773 = vmatpush1.bf16.msra.mxu0 0
        %774 = vmatprep.subr.bf16.mxu0 0
        %775 = vmatpush1.bf16.msra.mxu0 0
        %776 = vmatprep.subr.bf16.mxu0 0
        %777 = vmatpush1.bf16.msra.mxu0 0
        %778 = vmatprep.subr.bf16.mxu0 0
        %779 = vmatpush1.bf16.msra.mxu0 0
        %780 = vmatprep.subr.bf16.mxu0 0
        %781 = vmatpush1.bf16.msra.mxu0 0
        %782 = vmatprep.subr.bf16.mxu0 0
        %783 = vmatpush1.bf16.msra.mxu0 0
        %784 = vmatprep.subr.bf16.mxu0 0
        %785 = vmatpush1.bf16.msra.mxu0 0
        %786 = vmatprep.subr.bf16.mxu0 0
        %787 = vmatpush1.bf16.msra.mxu0 0
        %788 = vmatprep.subr.bf16.mxu0 0
        %789 = vmatpush1.bf16.msra.mxu0 0
        %790 = vmatprep.subr.bf16.mxu0 0
        %791 = vmatpush1.bf16.msra.mxu0 0
        %792 = vmatprep.subr.bf16.mxu0 0
        %793 = vmatpush1.bf16.msra.mxu0 0
        %794 = vmatprep.subr.bf16.mxu0 0
        %795 = vmatpush1.bf16.msra.mxu0 0
        %796 = vmatprep.subr.bf16.mxu0 0
        %797 = vmatpush1.bf16.msra.mxu0 0
        %798 = vmatprep.subr.bf16.mxu0 0
        %799 = vmatpush1.bf16.msra.mxu0 0
        %800 = vmatprep.mubr.bf16.mxu0 0
        %801 = vmatmul.mubr.bf16.gmra.mrb[0].mxu0 %v640
        %v802 = vpop.f32.mrb[0].mxu0
        %v803 = vadd.f32 %v754, %v802
        %v804 = vpop.f32.mrb[0].mxu0
        %v805 = vpop.f32.mrb[0].mxu0
        %v806 = vpop.f32.mrb[0].mxu0
        %807 = vdwg.mxu0
        %v808 = vmul.f32 %v677, 0.35355338
        %810 = vrot.lane.b32.xlu0 %v808, 120
        %v811 = vpop.permute.xlu0 %810
        %813 = vrot.lane.b32.xlu0 %v808, 112
        %v814 = vpop.permute.xlu0 %813
        %816 = vrot.lane.b32.xlu0 %v808, 104
        %v817 = vpop.permute.xlu0 %816
        %v819 = vpack.c.bf16 %v808, %v808
        %v820 = vpack.c.bf16 %v811, %v811
        %v821 = vpack.c.bf16 %v814, %v814
        %v822 = vpack.c.bf16 %v817, %v817
        %824 = vrot.lane.b32.xlu0 %v740, 120
        %v825 = vpop.permute.xlu0 %824
        %827 = vrot.lane.b32.xlu0 %v740, 112
        %v828 = vpop.permute.xlu0 %827
        %830 = vrot.lane.b32.xlu0 %v740, 104
        %v831 = vpop.permute.xlu0 %830
        %v833 = vpack.c.bf16 %v740, %v740
        %v834 = vpack.c.bf16 %v825, %v825
        %v835 = vpack.c.bf16 %v828, %v828
        %v836 = vpack.c.bf16 %v831, %v831
        %838 = vrot.lane.b32.xlu0 %v803, 120
        %v839 = vpop.permute.xlu0 %838
        %841 = vrot.lane.b32.xlu0 %v803, 112
        %v842 = vpop.permute.xlu0 %841
        %844 = vrot.lane.b32.xlu0 %v803, 104
        %v845 = vpop.permute.xlu0 %844
        %v847 = vpack.c.bf16 %v803, %v803
        %v848 = vpack.c.bf16 %v839, %v839
        %v849 = vpack.c.bf16 %v842, %v842
        %v850 = vpack.c.bf16 %v845, %v845
        %vm851 = vcmask 64512
        %v853 = vsel %vm851, %v819, 0
        %v856 = vsel %vm851, %v833, 0
        %858 = vmatprep.subr.bf16.mxu0 0
        %859 = vmatpush1.bf16.xpose.msra.mxu0 %v856
        %860 = vmatprep.subr.bf16.mxu0 0
        %861 = vmatpush1.bf16.xpose.msra.mxu0 0
        %862 = vmatprep.subr.bf16.mxu0 0
        %863 = vmatpush1.bf16.xpose.msra.mxu0 0
        %864 = vmatprep.subr.bf16.mxu0 0
        %865 = vmatpush1.bf16.xpose.msra.mxu0 0
        %866 = vmatprep.subr.bf16.mxu0 0
        %867 = vmatpush1.bf16.xpose.msra.mxu0 0
        %868 = vmatprep.subr.bf16.mxu0 0
        %869 = vmatpush1.bf16.xpose.msra.mxu0 0
        %870 = vmatprep.subr.bf16.mxu0 0
        %871 = vmatpush1.bf16.xpose.msra.mxu0 0
        %872 = vmatprep.subr.bf16.mxu0 0
        %873 = vmatpush1.bf16.xpose.msra.mxu0 0
        %874 = vmatprep.subr.bf16.mxu0 0
        %875 = vmatpush1.bf16.xpose.msra.mxu0 0
        %876 = vmatprep.subr.bf16.mxu0 0
        %877 = vmatpush1.bf16.xpose.msra.mxu0 0
        %878 = vmatprep.subr.bf16.mxu0 0
        %879 = vmatpush1.bf16.xpose.msra.mxu0 0
        %880 = vmatprep.subr.bf16.mxu0 0
        %881 = vmatpush1.bf16.xpose.msra.mxu0 0
        %882 = vmatprep.subr.bf16.mxu0 0
        %883 = vmatpush1.bf16.xpose.msra.mxu0 0
        %884 = vmatprep.subr.bf16.mxu0 0
        %885 = vmatpush1.bf16.xpose.msra.mxu0 0
        %886 = vmatprep.subr.bf16.mxu0 0
        %887 = vmatpush1.bf16.xpose.msra.mxu0 0
        %888 = vmatprep.subr.bf16.mxu0 0
        %889 = vmatpush1.bf16.xpose.msra.mxu0 0
        %890 = vmatprep.mubr.bf16.mxu0 0
        %891 = vmatmul.mubr.bf16.gmra.mrb[0].mxu0 %v853
        %v892 = vpop.f32.mrb[0].mxu0
        %v893 = vadd.f32 0.0, %v892
        %v894 = vpop.f32.mrb[0].mxu0
        %v895 = vpop.f32.mrb[0].mxu0
        %v896 = vpop.f32.mrb[0].mxu0
        %897 = vdwg.mxu0
        %v899 = vsel %vm851, %v820, 0
        %v902 = vsel %vm851, %v834, 0
        %904 = vmatprep.subr.bf16.mxu0 0
        %905 = vmatpush1.bf16.xpose.msra.mxu0 %v902
        %906 = vmatprep.subr.bf16.mxu0 0
        %907 = vmatpush1.bf16.xpose.msra.mxu0 0
        %908 = vmatprep.subr.bf16.mxu0 0
        %909 = vmatpush1.bf16.xpose.msra.mxu0 0
        %910 = vmatprep.subr.bf16.mxu0 0
        %911 = vmatpush1.bf16.xpose.msra.mxu0 0
        %912 = vmatprep.subr.bf16.mxu0 0
        %913 = vmatpush1.bf16.xpose.msra.mxu0 0
        %914 = vmatprep.subr.bf16.mxu0 0
        %915 = vmatpush1.bf16.xpose.msra.mxu0 0
        %916 = vmatprep.subr.bf16.mxu0 0
        %917 = vmatpush1.bf16.xpose.msra.mxu0 0
        %918 = vmatprep.subr.bf16.mxu0 0
        %919 = vmatpush1.bf16.xpose.msra.mxu0 0
        %920 = vmatprep.subr.bf16.mxu0 0
        %921 = vmatpush1.bf16.xpose.msra.mxu0 0
        %922 = vmatprep.subr.bf16.mxu0 0
        %923 = vmatpush1.bf16.xpose.msra.mxu0 0
        %924 = vmatprep.subr.bf16.mxu0 0
        %925 = vmatpush1.bf16.xpose.msra.mxu0 0
        %926 = vmatprep.subr.bf16.mxu0 0
        %927 = vmatpush1.bf16.xpose.msra.mxu0 0
        %928 = vmatprep.subr.bf16.mxu0 0
        %929 = vmatpush1.bf16.xpose.msra.mxu0 0
        %930 = vmatprep.subr.bf16.mxu0 0
        %931 = vmatpush1.bf16.xpose.msra.mxu0 0
        %932 = vmatprep.subr.bf16.mxu0 0
        %933 = vmatpush1.bf16.xpose.msra.mxu0 0
        %934 = vmatprep.subr.bf16.mxu0 0
        %935 = vmatpush1.bf16.xpose.msra.mxu0 0
        %936 = vmatprep.mubr.bf16.mxu0 0
        %937 = vmatmul.mubr.bf16.gmra.mrb[0].mxu0 %v899
        %v938 = vpop.f32.mrb[0].mxu0
        %v939 = vadd.f32 0.0, %v938
        %v940 = vpop.f32.mrb[0].mxu0
        %v941 = vpop.f32.mrb[0].mxu0
        %v942 = vpop.f32.mrb[0].mxu0
        %943 = vdwg.mxu0
        %v945 = vsel %vm851, %v821, 0
        %v948 = vsel %vm851, %v835, 0
        %950 = vmatprep.subr.bf16.mxu0 0
        %951 = vmatpush1.bf16.xpose.msra.mxu0 %v948
        %952 = vmatprep.subr.bf16.mxu0 0
        %953 = vmatpush1.bf16.xpose.msra.mxu0 0
        %954 = vmatprep.subr.bf16.mxu0 0
        %955 = vmatpush1.bf16.xpose.msra.mxu0 0
        %956 = vmatprep.subr.bf16.mxu0 0
        %957 = vmatpush1.bf16.xpose.msra.mxu0 0
        %958 = vmatprep.subr.bf16.mxu0 0
        %959 = vmatpush1.bf16.xpose.msra.mxu0 0
        %960 = vmatprep.subr.bf16.mxu0 0
        %961 = vmatpush1.bf16.xpose.msra.mxu0 0
        %962 = vmatprep.subr.bf16.mxu0 0
        %963 = vmatpush1.bf16.xpose.msra.mxu0 0
        %964 = vmatprep.subr.bf16.mxu0 0
        %965 = vmatpush1.bf16.xpose.msra.mxu0 0
        %966 = vmatprep.subr.bf16.mxu0 0
        %967 = vmatpush1.bf16.xpose.msra.mxu0 0
        %968 = vmatprep.subr.bf16.mxu0 0
        %969 = vmatpush1.bf16.xpose.msra.mxu0 0
        %970 = vmatprep.subr.bf16.mxu0 0
        %971 = vmatpush1.bf16.xpose.msra.mxu0 0
        %972 = vmatprep.subr.bf16.mxu0 0
        %973 = vmatpush1.bf16.xpose.msra.mxu0 0
        %974 = vmatprep.subr.bf16.mxu0 0
        %975 = vmatpush1.bf16.xpose.msra.mxu0 0
        %976 = vmatprep.subr.bf16.mxu0 0
        %977 = vmatpush1.bf16.xpose.msra.mxu0 0
        %978 = vmatprep.subr.bf16.mxu0 0
        %979 = vmatpush1.bf16.xpose.msra.mxu0 0
        %980 = vmatprep.subr.bf16.mxu0 0
        %981 = vmatpush1.bf16.xpose.msra.mxu0 0
        %982 = vmatprep.mubr.bf16.mxu0 0
        %983 = vmatmul.mubr.bf16.gmra.mrb[0].mxu0 %v945
        %v984 = vpop.f32.mrb[0].mxu0
        %v985 = vadd.f32 0.0, %v984
        %v986 = vpop.f32.mrb[0].mxu0
        %v987 = vpop.f32.mrb[0].mxu0
        %v988 = vpop.f32.mrb[0].mxu0
        %989 = vdwg.mxu0
        %v991 = vsel %vm851, %v822, 0
        %v994 = vsel %vm851, %v836, 0
        %996 = vmatprep.subr.bf16.mxu0 0
        %997 = vmatpush1.bf16.xpose.msra.mxu0 %v994
        %998 = vmatprep.subr.bf16.mxu0 0
        %999 = vmatpush1.bf16.xpose.msra.mxu0 0
        %1000 = vmatprep.subr.bf16.mxu0 0
        %1001 = vmatpush1.bf16.xpose.msra.mxu0 0
        %1002 = vmatprep.subr.bf16.mxu0 0
        %1003 = vmatpush1.bf16.xpose.msra.mxu0 0
        %1004 = vmatprep.subr.bf16.mxu0 0
        %1005 = vmatpush1.bf16.xpose.msra.mxu0 0
        %1006 = vmatprep.subr.bf16.mxu0 0
        %1007 = vmatpush1.bf16.xpose.msra.mxu0 0
        %1008 = vmatprep.subr.bf16.mxu0 0
        %1009 = vmatpush1.bf16.xpose.msra.mxu0 0
        %1010 = vmatprep.subr.bf16.mxu0 0
        %1011 = vmatpush1.bf16.xpose.msra.mxu0 0
        %1012 = vmatprep.subr.bf16.mxu0 0
        %1013 = vmatpush1.bf16.xpose.msra.mxu0 0
        %1014 = vmatprep.subr.bf16.mxu0 0
        %1015 = vmatpush1.bf16.xpose.msra.mxu0 0
        %1016 = vmatprep.subr.bf16.mxu0 0
        %1017 = vmatpush1.bf16.xpose.msra.mxu0 0
        %1018 = vmatprep.subr.bf16.mxu0 0
        %1019 = vmatpush1.bf16.xpose.msra.mxu0 0
        %1020 = vmatprep.subr.bf16.mxu0 0
        %1021 = vmatpush1.bf16.xpose.msra.mxu0 0
        %1022 = vmatprep.subr.bf16.mxu0 0
        %1023 = vmatpush1.bf16.xpose.msra.mxu0 0
        %1024 = vmatprep.subr.bf16.mxu0 0
        %1025 = vmatpush1.bf16.xpose.msra.mxu0 0
        %1026 = vmatprep.subr.bf16.mxu0 0
        %1027 = vmatpush1.bf16.xpose.msra.mxu0 0
        %1028 = vmatprep.mubr.bf16.mxu0 0
        %1029 = vmatmul.mubr.bf16.gmra.mrb[0].mxu0 %v991
        %v1030 = vpop.f32.mrb[0].mxu0
        %v1031 = vadd.f32 0.0, %v1030
        %v1032 = vpop.f32.mrb[0].mxu0
        %v1033 = vpop.f32.mrb[0].mxu0
        %v1034 = vpop.f32.mrb[0].mxu0
        %1035 = vdwg.mxu0
        %v1036 = vsel %vm851, %v893, -inf
        %1037 = vmax.xlane.f32.xlu0 %v1036
        %v1038 = vpop.xlane.xlu0 %1037
        %v1039 = vsel %vm851, %v939, -inf
        %1040 = vmax.xlane.f32.xlu0 %v1039
        %v1041 = vpop.xlane.xlu0 %1040
        %v1042 = vsel %vm851, %v985, -inf
        %1043 = vmax.xlane.f32.xlu0 %v1042
        %v1044 = vpop.xlane.xlu0 %1043
        %v1045 = vsel %vm851, %v1031, -inf
        %1046 = vmax.xlane.f32.xlu0 %v1045
        %v1047 = vpop.xlane.xlu0 %1046
        %v1048 = vsub.f32 %v893, %v1038
        %v1049 = vsub.f32 %v939, %v1041
        %v1050 = vsub.f32 %v985, %v1044
        %v1051 = vsub.f32 %v1031, %v1047
        %v1052 = vmul.f32 %v1048, 1.442695
        %v1053 = vpow.pop %v1052
        %v1054 = vmul.f32 %v1049, 1.442695
        %v1055 = vpow.pop %v1054
        %v1056 = vmul.f32 %v1050, 1.442695
        %v1057 = vpow.pop %v1056
        %v1058 = vmul.f32 %v1051, 1.442695
        %v1059 = vpow.pop %v1058
        %v1060 = vsel %vm851, %v1053, 0.0
        %1061 = vadd.xlane.f32.xlu0 %v1060
        %v1062 = vpop.xlane.xlu0 %1061
        %v1063 = vsel %vm851, %v1055, 0.0
        %1064 = vadd.xlane.f32.xlu0 %v1063
        %v1065 = vpop.xlane.xlu0 %1064
        %v1066 = vsel %vm851, %v1057, 0.0
        %1067 = vadd.xlane.f32.xlu0 %v1066
        %v1068 = vpop.xlane.xlu0 %1067
        %v1069 = vsel %vm851, %v1059, 0.0
        %1070 = vadd.xlane.f32.xlu0 %v1069
        %v1071 = vpop.xlane.xlu0 %1070
        %v1072 = vrcp.pop %v1062
        %v1073 = vrcp.pop %v1065
        %v1074 = vrcp.pop %v1068
        %v1075 = vrcp.pop %v1071
        %v1076 = vmul.f32 %v1053, %v1072
        %v1077 = vmul.f32 %v1055, %v1073
        %v1078 = vmul.f32 %v1057, %v1074
        %v1079 = vmul.f32 %v1059, %v1075
        %v1080 = vsel %vm851, %v1076, 0.0
        %v1081 = vsel %vm851, %v1077, 0.0
        %v1082 = vadd.f32 %v1080, %v1081
        %v1083 = vsel %vm851, %v1078, 0.0
        %v1084 = vadd.f32 %v1082, %v1083
        %v1085 = vsel %vm851, %v1079, 0.0
        %v1086 = vadd.f32 %v1084, %v1085
        %v1087 = vrcp.pop 4.0
        %v1088 = vmul.f32 %v1086, %v1087
        %1089 = vst.msk [vmem:[%s573] sm:$0xff] %vm851, %v1088
        %v1090 = vpack.c.bf16 %v1076, %v1076
        %v1091 = vpack.c.bf16 %v1077, %v1077
        %v1092 = vpack.c.bf16 %v1078, %v1078
        %v1093 = vpack.c.bf16 %v1079, %v1079
        %v1095 = vsel %vm851, %v1090, 0
        %vm1097 = vcmask 1043456
        %v1099 = vsel %vm1097, %v847, 0
        %1101 = vmatprep.subr.bf16.mxu0 0
        %1102 = vmatpush1.bf16.msra.mxu0 %v1099
        %1103 = vmatprep.subr.bf16.mxu0 0
        %1104 = vmatpush1.bf16.msra.mxu0 0
        %1105 = vmatprep.subr.bf16.mxu0 0
        %1106 = vmatpush1.bf16.msra.mxu0 0
        %1107 = vmatprep.subr.bf16.mxu0 0
        %1108 = vmatpush1.bf16.msra.mxu0 0
        %1109 = vmatprep.subr.bf16.mxu0 0
        %1110 = vmatpush1.bf16.msra.mxu0 0
        %1111 = vmatprep.subr.bf16.mxu0 0
        %1112 = vmatpush1.bf16.msra.mxu0 0
        %1113 = vmatprep.subr.bf16.mxu0 0
        %1114 = vmatpush1.bf16.msra.mxu0 0
        %1115 = vmatprep.subr.bf16.mxu0 0
        %1116 = vmatpush1.bf16.msra.mxu0 0
        %1117 = vmatprep.subr.bf16.mxu0 0
        %1118 = vmatpush1.bf16.msra.mxu0 0
        %1119 = vmatprep.subr.bf16.mxu0 0
        %1120 = vmatpush1.bf16.msra.mxu0 0
        %1121 = vmatprep.subr.bf16.mxu0 0
        %1122 = vmatpush1.bf16.msra.mxu0 0
        %1123 = vmatprep.subr.bf16.mxu0 0
        %1124 = vmatpush1.bf16.msra.mxu0 0
        %1125 = vmatprep.subr.bf16.mxu0 0
        %1126 = vmatpush1.bf16.msra.mxu0 0
        %1127 = vmatprep.subr.bf16.mxu0 0
        %1128 = vmatpush1.bf16.msra.mxu0 0
        %1129 = vmatprep.subr.bf16.mxu0 0
        %1130 = vmatpush1.bf16.msra.mxu0 0
        %1131 = vmatprep.subr.bf16.mxu0 0
        %1132 = vmatpush1.bf16.msra.mxu0 0
        %1133 = vmatprep.mubr.bf16.mxu0 0
        %1134 = vmatmul.mubr.bf16.gmra.mrb[0].mxu0 %v1095
        %v1135 = vpop.f32.mrb[0].mxu0
        %v1136 = vadd.f32 0.0, %v1135
        %v1137 = vpop.f32.mrb[0].mxu0
        %v1138 = vpop.f32.mrb[0].mxu0
        %v1139 = vpop.f32.mrb[0].mxu0
        %1140 = vdwg.mxu0
        %v1142 = vsel %vm851, %v1091, 0
        %v1145 = vsel %vm1097, %v848, 0
        %1147 = vmatprep.subr.bf16.mxu0 0
        %1148 = vmatpush1.bf16.msra.mxu0 %v1145
        %1149 = vmatprep.subr.bf16.mxu0 0
        %1150 = vmatpush1.bf16.msra.mxu0 0
        %1151 = vmatprep.subr.bf16.mxu0 0
        %1152 = vmatpush1.bf16.msra.mxu0 0
        %1153 = vmatprep.subr.bf16.mxu0 0
        %1154 = vmatpush1.bf16.msra.mxu0 0
        %1155 = vmatprep.subr.bf16.mxu0 0
        %1156 = vmatpush1.bf16.msra.mxu0 0
        %1157 = vmatprep.subr.bf16.mxu0 0
        %1158 = vmatpush1.bf16.msra.mxu0 0
        %1159 = vmatprep.subr.bf16.mxu0 0
        %1160 = vmatpush1.bf16.msra.mxu0 0
        %1161 = vmatprep.subr.bf16.mxu0 0
        %1162 = vmatpush1.bf16.msra.mxu0 0
        %1163 = vmatprep.subr.bf16.mxu0 0
        %1164 = vmatpush1.bf16.msra.mxu0 0
        %1165 = vmatprep.subr.bf16.mxu0 0
        %1166 = vmatpush1.bf16.msra.mxu0 0
        %1167 = vmatprep.subr.bf16.mxu0 0
        %1168 = vmatpush1.bf16.msra.mxu0 0
        %1169 = vmatprep.subr.bf16.mxu0 0
        %1170 = vmatpush1.bf16.msra.mxu0 0
        %1171 = vmatprep.subr.bf16.mxu0 0
        %1172 = vmatpush1.bf16.msra.mxu0 0
        %1173 = vmatprep.subr.bf16.mxu0 0
        %1174 = vmatpush1.bf16.msra.mxu0 0
        %1175 = vmatprep.subr.bf16.mxu0 0
        %1176 = vmatpush1.bf16.msra.mxu0 0
        %1177 = vmatprep.subr.bf16.mxu0 0
        %1178 = vmatpush1.bf16.msra.mxu0 0
        %1179 = vmatprep.mubr.bf16.mxu0 0
        %1180 = vmatmul.mubr.bf16.gmra.mrb[0].mxu0 %v1142
        %v1181 = vpop.f32.mrb[0].mxu0
        %v1182 = vadd.f32 0.0, %v1181
        %v1183 = vpop.f32.mrb[0].mxu0
        %v1184 = vpop.f32.mrb[0].mxu0
        %v1185 = vpop.f32.mrb[0].mxu0
        %1186 = vdwg.mxu0
        %v1188 = vsel %vm851, %v1092, 0
        %v1191 = vsel %vm1097, %v849, 0
        %1193 = vmatprep.subr.bf16.mxu0 0
        %1194 = vmatpush1.bf16.msra.mxu0 %v1191
        %1195 = vmatprep.subr.bf16.mxu0 0
        %1196 = vmatpush1.bf16.msra.mxu0 0
        %1197 = vmatprep.subr.bf16.mxu0 0
        %1198 = vmatpush1.bf16.msra.mxu0 0
        %1199 = vmatprep.subr.bf16.mxu0 0
        %1200 = vmatpush1.bf16.msra.mxu0 0
        %1201 = vmatprep.subr.bf16.mxu0 0
        %1202 = vmatpush1.bf16.msra.mxu0 0
        %1203 = vmatprep.subr.bf16.mxu0 0
        %1204 = vmatpush1.bf16.msra.mxu0 0
        %1205 = vmatprep.subr.bf16.mxu0 0
        %1206 = vmatpush1.bf16.msra.mxu0 0
        %1207 = vmatprep.subr.bf16.mxu0 0
        %1208 = vmatpush1.bf16.msra.mxu0 0
        %1209 = vmatprep.subr.bf16.mxu0 0
        %1210 = vmatpush1.bf16.msra.mxu0 0
        %1211 = vmatprep.subr.bf16.mxu0 0
        %1212 = vmatpush1.bf16.msra.mxu0 0
        %1213 = vmatprep.subr.bf16.mxu0 0
        %1214 = vmatpush1.bf16.msra.mxu0 0
        %1215 = vmatprep.subr.bf16.mxu0 0
        %1216 = vmatpush1.bf16.msra.mxu0 0
        %1217 = vmatprep.subr.bf16.mxu0 0
        %1218 = vmatpush1.bf16.msra.mxu0 0
        %1219 = vmatprep.subr.bf16.mxu0 0
        %1220 = vmatpush1.bf16.msra.mxu0 0
        %1221 = vmatprep.subr.bf16.mxu0 0
        %1222 = vmatpush1.bf16.msra.mxu0 0
        %1223 = vmatprep.subr.bf16.mxu0 0
        %1224 = vmatpush1.bf16.msra.mxu0 0
        %1225 = vmatprep.mubr.bf16.mxu0 0
        %1226 = vmatmul.mubr.bf16.gmra.mrb[0].mxu0 %v1188
        %v1227 = vpop.f32.mrb[0].mxu0
        %v1228 = vadd.f32 0.0, %v1227
        %v1229 = vpop.f32.mrb[0].mxu0
        %v1230 = vpop.f32.mrb[0].mxu0
        %v1231 = vpop.f32.mrb[0].mxu0
        %1232 = vdwg.mxu0
        %v1234 = vsel %vm851, %v1093, 0
        %v1237 = vsel %vm1097, %v850, 0
        %1239 = vmatprep.subr.bf16.mxu0 0
        %1240 = vmatpush1.bf16.msra.mxu0 %v1237
        %1241 = vmatprep.subr.bf16.mxu0 0
        %1242 = vmatpush1.bf16.msra.mxu0 0
        %1243 = vmatprep.subr.bf16.mxu0 0
        %1244 = vmatpush1.bf16.msra.mxu0 0
        %1245 = vmatprep.subr.bf16.mxu0 0
        %1246 = vmatpush1.bf16.msra.mxu0 0
        %1247 = vmatprep.subr.bf16.mxu0 0
        %1248 = vmatpush1.bf16.msra.mxu0 0
        %1249 = vmatprep.subr.bf16.mxu0 0
        %1250 = vmatpush1.bf16.msra.mxu0 0
        %1251 = vmatprep.subr.bf16.mxu0 0
        %1252 = vmatpush1.bf16.msra.mxu0 0
        %1253 = vmatprep.subr.bf16.mxu0 0
        %1254 = vmatpush1.bf16.msra.mxu0 0
        %1255 = vmatprep.subr.bf16.mxu0 0
        %1256 = vmatpush1.bf16.msra.mxu0 0
        %1257 = vmatprep.subr.bf16.mxu0 0
        %1258 = vmatpush1.bf16.msra.mxu0 0
        %1259 = vmatprep.subr.bf16.mxu0 0
        %1260 = vmatpush1.bf16.msra.mxu0 0
        %1261 = vmatprep.subr.bf16.mxu0 0
        %1262 = vmatpush1.bf16.msra.mxu0 0
        %1263 = vmatprep.subr.bf16.mxu0 0
        %1264 = vmatpush1.bf16.msra.mxu0 0
        %1265 = vmatprep.subr.bf16.mxu0 0
        %1266 = vmatpush1.bf16.msra.mxu0 0
        %1267 = vmatprep.subr.bf16.mxu0 0
        %1268 = vmatpush1.bf16.msra.mxu0 0
        %1269 = vmatprep.subr.bf16.mxu0 0
        %1270 = vmatpush1.bf16.msra.mxu0 0
        %1271 = vmatprep.mubr.bf16.mxu0 0
        %1272 = vmatmul.mubr.bf16.gmra.mrb[0].mxu0 %v1234
        %v1273 = vpop.f32.mrb[0].mxu0
        %v1274 = vadd.f32 0.0, %v1273
        %v1275 = vpop.f32.mrb[0].mxu0
        %v1276 = vpop.f32.mrb[0].mxu0
        %v1277 = vpop.f32.mrb[0].mxu0
        %1278 = vdwg.mxu0
        %1280 = vrot.lane.b32.xlu0 %v1182, 8
        %v1281 = vpop.permute.xlu0 %1280
        %1284 = vrot.lane.b32.xlu0 %v1228, 16
        %v1285 = vpop.permute.xlu0 %1284
        %1288 = vrot.lane.b32.xlu0 %v1274, 24
        %v1289 = vpop.permute.xlu0 %1288
        %v1291 = vsel %vm851, %v1136, %v1281
        %vm1292 = vcmask 130048
        %v1293 = vsel %vm1292, %v1291, %v1285
        %vm1294 = vcmask 195584
        %v1295 = vsel %vm1294, %v1293, %v1289
        %v1296 = vpack.c.bf16 %v1295, %v1295
        %v1297 = vld [vmem:[%s7] sm:$0xf]
        %v1298 = vld [vmem:[%s7 + $0x4] sm:$0xf]
        %v1299 = vld [vmem:[%s7 + $0x8] sm:$0xf]
        %v1300 = vld [vmem:[%s7 + $0xc] sm:$0xf]
        %v1301 = vld [vmem:[%s8] sm:$0x1]
        %v1303 = vlaneseq
        %v1304 = vshrl.u32 %v1303, 7
        %v1305 = vsub.s32 0, %v1304
        %v1306 = vrot.slane %v1301, %v1305
        %v1312 = vunpack.c.l.b16 %v1297
        %v1313 = vunpack.c.l.b16 %v1298
        %v1314 = vunpack.c.l.b16 %v1299
        %v1315 = vunpack.c.l.b16 %v1300
        %v1316 = vpack.c.b16 %v1313, %v1312
        %v1317 = vpack.c.b16 %v1315, %v1314
        %v1321 = vsel %vm586, %v1296, 0
        %1323 = vmatprep.subr.bf16.mxu0 0
        %1324 = vmatpush1.bf16.msra.mxu0 %v1316
        %1325 = vmatprep.subr.bf16.mxu0 0
        %1326 = vmatpush1.bf16.msra.mxu0 %v1317
        %1327 = vmatprep.subr.bf16.mxu0 0
        %1328 = vmatpush1.bf16.msra.mxu0 0
        %1329 = vmatprep.subr.bf16.mxu0 0
        %1330 = vmatpush1.bf16.msra.mxu0 0
        %1331 = vmatprep.subr.bf16.mxu0 0
        %1332 = vmatpush1.bf16.msra.mxu0 0
        %1333 = vmatprep.subr.bf16.mxu0 0
        %1334 = vmatpush1.bf16.msra.mxu0 0
        %1335 = vmatprep.subr.bf16.mxu0 0
        %1336 = vmatpush1.bf16.msra.mxu0 0
        %1337 = vmatprep.subr.bf16.mxu0 0
        %1338 = vmatpush1.bf16.msra.mxu0 0
        %1339 = vmatprep.subr.bf16.mxu0 0
        %1340 = vmatpush1.bf16.msra.mxu0 0
        %1341 = vmatprep.subr.bf16.mxu0 0
        %1342 = vmatpush1.bf16.msra.mxu0 0
        %1343 = vmatprep.subr.bf16.mxu0 0
        %1344 = vmatpush1.bf16.msra.mxu0 0
        %1345 = vmatprep.subr.bf16.mxu0 0
        %1346 = vmatpush1.bf16.msra.mxu0 0
        %1347 = vmatprep.subr.bf16.mxu0 0
        %1348 = vmatpush1.bf16.msra.mxu0 0
        %1349 = vmatprep.subr.bf16.mxu0 0
        %1350 = vmatpush1.bf16.msra.mxu0 0
        %1351 = vmatprep.subr.bf16.mxu0 0
        %1352 = vmatpush1.bf16.msra.mxu0 0
        %1353 = vmatprep.subr.bf16.mxu0 0
        %1354 = vmatpush1.bf16.msra.mxu0 0
        %1355 = vmatprep.mubr.bf16.mxu0 0
        %1356 = vmatmul.mubr.bf16.gmra.mrb[0].mxu0 %v1321
        %v1357 = vpop.f32.mrb[0].mxu0
        %v1358 = vadd.f32 %v1306, %v1357
        %v1359 = vpop.f32.mrb[0].mxu0
        %v1360 = vpop.f32.mrb[0].mxu0
        %v1361 = vpop.f32.mrb[0].mxu0
        %1362 = vdwg.mxu0
        %v1363 = vadd.f32 %v583, %v1358
        %v1364 = vsel %vm586, %v1363, 0.0
        %1365 = vadd.xlane.f32.xlu0 %v1364
        %v1366 = vpop.xlane.xlu0 %1365
        %v1367 = vmul.f32 %v1366, %v590
        %v1368 = vsub.f32 %v1363, %v1367
        %v1369 = vmul.f32 %v1368, %v1368
        %v1370 = vsel %vm586, %v1369, 0.0
        %1371 = vadd.xlane.f32.xlu0 %v1370
        %v1372 = vpop.xlane.xlu0 %1371
        %v1373 = vmul.f32 %v1372, %v590
        %v1374 = vadd.f32 %v1373, 1e-05
        %v1375 = vrsqrt.pop %v1374
        %v1376 = vmul.f32 %v1368, %v1375
        %v1377 = vmul.f32 %v1376, %v605
        %v1378 = vadd.f32 %v1377, %v612
        %v1379 = vpack.c.bf16 %v1378, %v1378
        %v1380 = vld [vmem:[%s9] sm:$0xf]
        %v1381 = vld [vmem:[%s9 + $0x4] sm:$0xf]
        %v1382 = vld [vmem:[%s9 + $0x8] sm:$0xf]
        %v1383 = vld [vmem:[%s9 + $0xc] sm:$0xf]
        %v1384 = vld [vmem:[%s10] sm:$0x1]
        %v1386 = vlaneseq
        %v1387 = vshrl.u32 %v1386, 7
        %v1388 = vsub.s32 0, %v1387
        %v1389 = vrot.slane %v1384, %v1388
        %v1395 = vunpack.c.l.b16 %v1380
        %v1396 = vunpack.c.l.b16 %v1381
        %v1397 = vunpack.c.l.b16 %v1382
        %v1398 = vunpack.c.l.b16 %v1383
        %v1399 = vpack.c.b16 %v1396, %v1395
        %v1400 = vpack.c.b16 %v1398, %v1397
        %v1404 = vsel %vm586, %v1379, 0
        %1406 = vmatprep.subr.bf16.mxu0 0
        %1407 = vmatpush1.bf16.msra.mxu0 %v1399
        %1408 = vmatprep.subr.bf16.mxu0 0
        %1409 = vmatpush1.bf16.msra.mxu0 %v1400
        %1410 = vmatprep.subr.bf16.mxu0 0
        %1411 = vmatpush1.bf16.msra.mxu0 0
        %1412 = vmatprep.subr.bf16.mxu0 0
        %1413 = vmatpush1.bf16.msra.mxu0 0
        %1414 = vmatprep.subr.bf16.mxu0 0
        %1415 = vmatpush1.bf16.msra.mxu0 0
        %1416 = vmatprep.subr.bf16.mxu0 0
        %1417 = vmatpush1.bf16.msra.mxu0 0
        %1418 = vmatprep.subr.bf16.mxu0 0
        %1419 = vmatpush1.bf16.msra.mxu0 0
        %1420 = vmatprep.subr.bf16.mxu0 0
        %1421 = vmatpush1.bf16.msra.mxu0 0
        %1422 = vmatprep.subr.bf16.mxu0 0
        %1423 = vmatpush1.bf16.msra.mxu0 0
        %1424 = vmatprep.subr.bf16.mxu0 0
        %1425 = vmatpush1.bf16.msra.mxu0 0
        %1426 = vmatprep.subr.bf16.mxu0 0
        %1427 = vmatpush1.bf16.msra.mxu0 0
        %1428 = vmatprep.subr.bf16.mxu0 0
        %1429 = vmatpush1.bf16.msra.mxu0 0
        %1430 = vmatprep.subr.bf16.mxu0 0
        %1431 = vmatpush1.bf16.msra.mxu0 0
        %1432 = vmatprep.subr.bf16.mxu0 0
        %1433 = vmatpush1.bf16.msra.mxu0 0
        %1434 = vmatprep.subr.bf16.mxu0 0
        %1435 = vmatpush1.bf16.msra.mxu0 0
        %1436 = vmatprep.subr.bf16.mxu0 0
        %1437 = vmatpush1.bf16.msra.mxu0 0
        %1438 = vmatprep.mubr.bf16.mxu0 0
        %1439 = vmatmul.mubr.bf16.gmra.mrb[0].mxu0 %v1404
        %v1440 = vpop.f32.mrb[0].mxu0
        %v1441 = vadd.f32 %v1389, %v1440
        %v1442 = vpop.f32.mrb[0].mxu0
        %v1443 = vpop.f32.mrb[0].mxu0
        %v1444 = vpop.f32.mrb[0].mxu0
        %1445 = vdwg.mxu0
        %v1446 = vmax.f32 %v1441, 0.0
        %v1447 = vpack.c.bf16 %v1446, %v1446
        %v1448 = vld [vmem:[%s11] sm:$0xf]
        %v1449 = vld [vmem:[%s11 + $0x4] sm:$0xf]
        %v1450 = vld [vmem:[%s11 + $0x8] sm:$0xf]
        %v1451 = vld [vmem:[%s11 + $0xc] sm:$0xf]
        %v1452 = vld [vmem:[%s11 + $0x10] sm:$0xf]
        %v1453 = vld [vmem:[%s11 + $0x14] sm:$0xf]
        %v1454 = vld [vmem:[%s11 + $0x18] sm:$0xf]
        %v1455 = vld [vmem:[%s11 + $0x1c] sm:$0xf]
        %v1456 = vld [vmem:[%s12] sm:$0x1]
        %v1458 = vlaneseq
        %v1459 = vshrl.u32 %v1458, 7
        %v1460 = vsub.s32 0, %v1459
        %v1461 = vrot.slane %v1456, %v1460
        %v1471 = vunpack.c.l.b16 %v1448
        %v1472 = vunpack.c.l.b16 %v1449
        %v1473 = vunpack.c.l.b16 %v1450
        %v1474 = vunpack.c.l.b16 %v1451
        %v1475 = vunpack.c.l.b16 %v1452
        %v1476 = vunpack.c.l.b16 %v1453
        %v1477 = vunpack.c.l.b16 %v1454
        %v1478 = vunpack.c.l.b16 %v1455
        %v1479 = vpack.c.b16 %v1472, %v1471
        %v1480 = vpack.c.b16 %v1474, %v1473
        %v1481 = vpack.c.b16 %v1476, %v1475
        %v1482 = vpack.c.b16 %v1478, %v1477
        %vm1487 = vcmask 523264
        %v1489 = vsel %vm1487, %v1447, 0
        %1491 = vmatprep.subr.bf16.mxu0 0
        %1492 = vmatpush1.bf16.msra.mxu0 %v1479
        %1493 = vmatprep.subr.bf16.mxu0 0
        %1494 = vmatpush1.bf16.msra.mxu0 %v1480
        %1495 = vmatprep.subr.bf16.mxu0 0
        %1496 = vmatpush1.bf16.msra.mxu0 %v1481
        %1497 = vmatprep.subr.bf16.mxu0 0
        %1498 = vmatpush1.bf16.msra.mxu0 %v1482
        %1499 = vmatprep.subr.bf16.mxu0 0
        %1500 = vmatpush1.bf16.msra.mxu0 0
        %1501 = vmatprep.subr.bf16.mxu0 0
        %1502 = vmatpush1.bf16.msra.mxu0 0
        %1503 = vmatprep.subr.bf16.mxu0 0
        %1504 = vmatpush1.bf16.msra.mxu0 0
        %1505 = vmatprep.subr.bf16.mxu0 0
        %1506 = vmatpush1.bf16.msra.mxu0 0
        %1507 = vmatprep.subr.bf16.mxu0 0
        %1508 = vmatpush1.bf16.msra.mxu0 0
        %1509 = vmatprep.subr.bf16.mxu0 0
        %1510 = vmatpush1.bf16.msra.mxu0 0
        %1511 = vmatprep.subr.bf16.mxu0 0
        %1512 = vmatpush1.bf16.msra.mxu0 0
        %1513 = vmatprep.subr.bf16.mxu0 0
        %1514 = vmatpush1.bf16.msra.mxu0 0
        %1515 = vmatprep.subr.bf16.mxu0 0
        %1516 = vmatpush1.bf16.msra.mxu0 0
        %1517 = vmatprep.subr.bf16.mxu0 0
        %1518 = vmatpush1.bf16.msra.mxu0 0
        %1519 = vmatprep.subr.bf16.mxu0 0
        %1520 = vmatpush1.bf16.msra.mxu0 0
        %1521 = vmatprep.subr.bf16.mxu0 0
        %1522 = vmatpush1.bf16.msra.mxu0 0
        %1523 = vmatprep.mubr.bf16.mxu0 0
        %1524 = vmatmul.mubr.bf16.gmra.mrb[0].mxu0 %v1489
        %v1525 = vpop.f32.mrb[0].mxu0
        %v1526 = vadd.f32 %v1461, %v1525
        %v1527 = vpop.f32.mrb[0].mxu0
        %v1528 = vpop.f32.mrb[0].mxu0
        %v1529 = vpop.f32.mrb[0].mxu0
        %1530 = vdwg.mxu0
        %v1531 = vadd.f32 %v1378, %v1526
        %v1532 = vld [vmem:[%s15] sm:$0x1]
        %v1533 = vld [vmem:[%s16] sm:$0x1]
        %v1534 = vsel %vm586, %v1531, 0.0
        %1535 = vadd.xlane.f32.xlu0 %v1534
        %v1536 = vpop.xlane.xlu0 %1535
        %v1537 = vmul.f32 %v1536, %v590
        %v1538 = vsub.f32 %v1531, %v1537
        %v1539 = vmul.f32 %v1538, %v1538
        %v1540 = vsel %vm586, %v1539, 0.0
        %1541 = vadd.xlane.f32.xlu0 %v1540
        %v1542 = vpop.xlane.xlu0 %1541
        %v1543 = vmul.f32 %v1542, %v590
        %v1544 = vadd.f32 %v1543, 1e-05
        %v1545 = vrsqrt.pop %v1544
        %v1546 = vmul.f32 %v1538, %v1545
        %v1548 = vlaneseq
        %v1549 = vshrl.u32 %v1548, 7
        %v1550 = vsub.s32 0, %v1549
        %v1551 = vrot.slane %v1532, %v1550
        %v1553 = vmul.f32 %v1546, %v1551
        %v1555 = vlaneseq
        %v1556 = vshrl.u32 %v1555, 7
        %v1557 = vsub.s32 0, %v1556
        %v1558 = vrot.slane %v1533, %v1557
        %v1560 = vadd.f32 %v1553, %v1558
        %1561 = vst.msk [vmem:[%s581] sm:$0xff] %vm586, %v1560
        %p1562 = scmp.lt.s32.totalorder %s33, 1
        %s1563 = scalar_select %p1562, %s33, 1
        %s1564 = smul.addr %s1563, 8
        %s1565 = scalar_lea.vmem %s17, %s1564
        %s1566 = sand.u32 %s429, 1
        %s1567 = scalar_lea.sflag [#allocation3], %s1566
        %s1568 = sand.u32 %s429, 1
        %s1569 = smul.addr %s1568, 8
        %s1570 = scalar_lea.vmem [#allocation2], %s1569
        // Predicated region
        $region89: #{transformer_encoder_layer.1} parent=87 // pred_check
          %p1571 = pneg %p413
        $region90: #{transformer_encoder_layer.1} parent=87 // pred_check_branch
          %1573 = sbr.rel (%p1571) target = $region92
        $region91: #{transformer_encoder_layer.1} parent=87 // pred_region
          _
        $region92: #{transformer_encoder_layer.1} parent=87 // pred_fallthru
          _
        // Predicated region
        $region93: #{transformer_encoder_layer.1} parent=87 // pred_check
          %p1574 = pneg %p439
        $region94: #{transformer_encoder_layer.1} parent=87 // pred_check_branch
          %1576 = sbr.rel (%p1574) target = $region96
        $region95: #{transformer_encoder_layer.1} parent=87 // pred_region
          %s1578 = ssub.s32 128, 128
          %1579 = vsyncadd %s1567, %s1578
          %s1580 = smul.addr %s33, 128
          %s1581 = scalar_lea.hbm %s18, %s1580
          %s1583 = sshll.u32 %s1570, 4
          %s1584 = int_to_ptr.vmem [resolvable:$true] %s1583
          %1586 = dma.vmem_to_hbm [thread:$0]  %s1584, 128, %s1581, %s1567
        $region96: #{transformer_encoder_layer.1} parent=87 // pred_fallthru
          _
      $region88: #{transformer_encoder_layer.1} parent=5 // pred_fallthru
        _
      %p1587 = scmp.le.s32.totalorder 2, %s28
      // Predicated region
      $region97: #{transformer_encoder_layer.1} parent=5 // pred_check
        %p1588 = pneg %p1587
      $region98: #{transformer_encoder_layer.1} parent=5 // pred_check_branch
        %1590 = sbr.rel (%p1588) target = $region100
      $region99: #{transformer_encoder_layer.1} parent=5 // pred_region
        %s1591 = ssub.s32 %s28, 2
        // Predicated region
        $region101: #{transformer_encoder_layer.1} parent=99 // pred_check
          %p1592 = pneg %p419
        $region102: #{transformer_encoder_layer.1} parent=99 // pred_check_branch
          %1594 = sbr.rel (%p1592) target = $region104
        $region103: #{transformer_encoder_layer.1} parent=99 // pred_region
          %p1595 = scmp.lt.s32.totalorder %s34, 1
          %s1596 = scalar_select %p1595, %s34, 1
          %s1597 = smul.addr %s1596, 8
          %s1598 = scalar_lea.vmem %s17, %s1597
        $region104: #{transformer_encoder_layer.1} parent=99 // pred_fallthru
          _
        // Predicated region
        $region105: #{transformer_encoder_layer.1} parent=99 // pred_check
          %p1599 = pneg %p445
        $region106: #{transformer_encoder_layer.1} parent=99 // pred_check_branch
          %1601 = sbr.rel (%p1599) target = $region108
        $region107: #{transformer_encoder_layer.1} parent=99 // pred_region
          %s1602 = sand.u32 %s430, 1
          %s1603 = scalar_lea.sflag [#allocation3], %s1602
          %s1604 = sand.u32 %s430, 1
          %s1605 = smul.addr %s1604, 8
          %s1606 = scalar_lea.vmem [#allocation2], %s1605
          %1607 = dma.done %s1603, 128
        $region108: #{transformer_encoder_layer.1} parent=99 // pred_fallthru
          _
      $region100: #{transformer_encoder_layer.1} parent=5 // pred_fallthru
        _
    $region6: #{transformer_encoder_layer.1} parent=1 // loop_footer
      %s32 = sadd.s32 1, %s28
    $region7: #{transformer_encoder_layer.1} parent=1 // loop_footer_branch
      %27 = sbr.rel target = $region3
    $region8: #{transformer_encoder_layer.1} parent=1 // loop_exit
      _
    %1608 = vsyncpa [#allocation3], 1
    %s1609 = scalar_lea.sflag [#allocation3], 1
    %1610 = vsyncpa %s1609, 1

</llo_original>
